<compile_context>
chip_gen: v7x
topology: tpu7x:2x2x1
jax: 0.10.0
libtpu: 0.0.40
codegen_flags: <defaults>
</compile_context>

<pallas_src>
import functools

import jax
import jax.numpy as jnp
from jax.experimental import pallas as pl
from jax.experimental.pallas import tpu as pltpu

EPS = 1e-5  # nn.InstanceNorm1d default eps


# -----------------------------------------------------------------------------
# Fused kernel: whole (batch-folded) forward pass in one invocation.
# -----------------------------------------------------------------------------
def _make_kernel(*, B, L, M, C, enc_k, n_spks, offA, offB):
    BL = B * L
    D = n_spks * C
    f32 = jnp.float32
    bf16 = jnp.bfloat16

    def kernel(frames_ref, hmem_ref, wA_ref, wB_ref, dect_ref,
               vc_ref, vd_ref, sc_ref, o_ref):

        def mm(a, w_ref, r0, nrows):
            # bf16 at the MXU inputs, f32 accumulation.
            return jnp.dot(a.astype(bf16), w_ref[r0:r0 + nrows, :],
                           preferred_element_type=f32)

        def inorm(h, g_row, b_row, slope):
            # Per-sample InstanceNorm over the L rows of each batch element,
            # two-pass variance, fused PReLU/LeakyReLU.
            W = h.shape[-1]
            h3 = h.reshape(B, L, W)
            mu = jnp.mean(h3, axis=1, keepdims=True)
            d = h3 - mu
            var = jnp.mean(d * d, axis=1, keepdims=True)
            out = (d * jax.lax.rsqrt(var + EPS)
                   * g_row.reshape(1, 1, -1) + b_row.reshape(1, 1, -1))
            out = jnp.where(out >= 0.0, out, out * slope)
            return out.reshape(BL, W)

        # ---------------- encoder ----------------
        h = mm(frames_ref[...], wA_ref, offA["enc_w1"], enc_k) + vc_ref[0:1, :]
        h = inorm(h, vc_ref[1:2, :], vc_ref[2:3, :], 0.01)          # LeakyReLU
        mix_w = mm(h, wA_ref, offA["enc_w2"], C) + vc_ref[3:4, :]   # (B*L, C)

        # ---------------- masknet.embed over [x_tag ; memory_slots] ----------------
        # The x tag channel is structurally 0 (F.pad), so x rows only see
        # emb_w1[:C]; the memory-slot rows (batch independent) are pre-folded
        # into hmem_ref by the wrapper.  IN stats are over the combined
        # L + M positions per sample, exactly as in the reference concat.
        prelu_e = sc_ref[0]
        h_top = mm(mix_w, wA_ref, offA["emb_w1x"], C) + vc_ref[4:5, :]   # (B*L, C)
        h_bot = hmem_ref[...]                                            # (M, C)
        inv_n = 1.0 / float(L + M)
        ht3 = h_top.reshape(B, L, C)
        mean = (jnp.sum(ht3, axis=1) + jnp.sum(h_bot, axis=0)[None, :]) * inv_n
        d_t = ht3 - mean[:, None, :]                                     # (B, L, C)
        d_b = h_bot[None, :, :] - mean[:, None, :]                       # (B, M, C)
        var = (jnp.sum(d_t * d_t, axis=1) + jnp.sum(d_b * d_b, axis=1)) * inv_n
        inv = jax.lax.rsqrt(var + EPS)[:, None, :]
        g = vc_ref[5:6, :].reshape(1, 1, -1)
        be = vc_ref[6:7, :].reshape(1, 1, -1)
        hcat = jnp.concatenate([d_t, d_b], axis=1) * inv * g + be        # (B, L+M, C)
        hcat = jnp.where(hcat >= 0.0, hcat, hcat * prelu_e)              # PReLU
        xm = (mm(hcat.reshape(B * (L + M), C), wA_ref, offA["emb_w2"], C)
              + vc_ref[7:8, :]).reshape(B, L + M, C)
        x_part = xm[:, :L, :]                                            # (B, L, C)
        mem_part = xm[:, L:, :]                                          # (B, M, C)

        # ---------------- intra_model: single-head cross attention ----------------
        # 1/sqrt(C) folded into Wq; K and V fused into one (C, 2C) matmul.
        q = mm(x_part.reshape(BL, C), wA_ref, offA["wq"], C).reshape(B, L, C)
        kv = mm(mem_part.reshape(B * M, C), wB_ref, offB["wkv"], C).reshape(B, M, -1)
        k = kv[:, :, :C]
        v = kv[:, :, C:2 * C]
        s = jnp.einsum("blc,bmc->blm", q.astype(bf16), k.astype(bf16),
                       preferred_element_type=f32)                       # (B, L, M)
        s = s - jnp.max(s, axis=-1, keepdims=True)
        p = jnp.exp(s)
        p = p * pl.reciprocal(jnp.sum(p, axis=-1, keepdims=True), approx=True)
        att = jnp.einsum("blm,bmc->blc", p.astype(bf16), v.astype(bf16),
                         preferred_element_type=f32)
        x_att = (x_part + att).reshape(BL, C)

        # ---------------- masknet.dislodge ----------------
        prelu_d = sc_ref[1]
        h = mm(x_att, wB_ref, offB["dis_w1"], C) + vd_ref[0:1, :]        # (B*L, D)
        h = inorm(h, vd_ref[1:2, :], vd_ref[2:3, :], prelu_d)            # PReLU
        est_mask = jnp.tanh(mm(h, wB_ref, offB["dis_w2"], D) + vd_ref[3:4, :])

        # ---------------- masked decoder, both speakers via block-diag weights ----------------
        sep = jnp.tile(mix_w, (1, n_spks)) * est_mask                    # (B*L, D)
        hd = mm(sep, wB_ref, offB["dec_w1"], D) + vd_ref[4:5, :]
        hd = inorm(hd, vd_ref[5:6, :], vd_ref[6:7, :], 0.01)             # LeakyReLU
        # Raw ConvTranspose frames for all speakers, lane-packed; overlap-add
        # and bias happen in the wrapper.
        o_ref[...] = mm(hd, dect_ref, 0, D).astype(o_ref.dtype)          # (B*L, n_spks*enc_k)

    return kernel


# -----------------------------------------------------------------------------
# Parameters (deterministic, in-script)
# -----------------------------------------------------------------------------
def init_params(key, *, C, n_spks, n_mem, enc_k):
    ks = jax.random.split(key, 24)

    def w(k, shape):
        fan_in = shape[0]
        return jax.random.normal(k, shape, jnp.float32) / jnp.sqrt(float(fan_in))

    def b(k, n):
        return 0.01 * jax.random.normal(k, (n,), jnp.float32)

    p = {}
    # ---- encoder: Conv1d(1, C, k, stride=k//2) ; IN(C) ; LeakyReLU ; Conv1d(C, C, 1)
    p["enc_w1"] = w(ks[0], (enc_k, C));        p["enc_b1"] = b(ks[1], C)
    p["enc_in_g"] = jnp.ones((C,), jnp.float32); p["enc_in_b"] = jnp.zeros((C,), jnp.float32)
    p["enc_w2"] = w(ks[2], (C, C));            p["enc_b2"] = b(ks[3], C)
    # ---- masknet.embed: Conv1d(C+1, C, 1) ; IN(C) ; PReLU ; Conv1d(C, C, 1)
    p["emb_w1"] = w(ks[4], (C + 1, C));        p["emb_b1"] = b(ks[5], C)
    p["emb_in_g"] = jnp.ones((C,), jnp.float32); p["emb_in_b"] = jnp.zeros((C,), jnp.float32)
    p["prelu_emb"] = jnp.asarray(0.25, jnp.float32)
    p["emb_w2"] = w(ks[6], (C, C));            p["emb_b2"] = b(ks[7], C)
    # ---- intra_model (supplied): single-head cross attention
    p["wq"] = w(ks[8], (C, C)); p["wk"] = w(ks[9], (C, C)); p["wv"] = w(ks[10], (C, C))
    # ---- masknet.dislodge: Conv1d(C, nS*C, 1) ; IN ; PReLU ; Conv1d(nS*C, nS*C, 1) ; Tanh
    D = n_spks * C
    p["dis_w1"] = w(ks[11], (C, D));           p["dis_b1"] = b(ks[12], D)
    p["dis_in_g"] = jnp.ones((D,), jnp.float32); p["dis_in_b"] = jnp.zeros((D,), jnp.float32)
    p["prelu_dis"] = jnp.asarray(0.25, jnp.float32)
    p["dis_w2"] = w(ks[13], (D, D));           p["dis_b2"] = b(ks[14], D)
    # ---- decoder: Conv1d(C, C, 1) ; IN(C) ; LeakyReLU ; ConvTranspose1d(C, 1, k, stride=k//2)
    p["dec_w1"] = w(ks[15], (C, C));           p["dec_b1"] = b(ks[16], C)
    p["dec_in_g"] = jnp.ones((C,), jnp.float32); p["dec_in_b"] = jnp.zeros((C,), jnp.float32)
    p["dect_w"] = w(ks[17], (C, enc_k))        # ConvTranspose weight (C, 1, k) -> (C, k)
    p["dect_b"] = 0.01 * jax.random.normal(ks[18], (), jnp.float32)
    # ---- memory_slots buffer: eye(C+1, n_mem) with last row = 1, stored (n_mem, C+1)
    eye = jnp.eye(C + 1, n_mem, dtype=jnp.float32)
    eye = eye.at[C, :].set(1.0)
    p["memory_slots"] = eye.T
    return p


def _block_diag(m, n):
    r, c = m.shape
    out = jnp.zeros((n * r, n * c), m.dtype)
    for i in range(n):
        out = out.at[i * r:(i + 1) * r, i * c:(i + 1) * c].set(m)
    return out


# -----------------------------------------------------------------------------
# Forward pass: one fused pallas_call (no grid: whole batch folded in)
# -----------------------------------------------------------------------------
def model_forward(mix, params, *, enc_k=16, n_spks=2, n_mem=8):
    f32, bf16 = jnp.float32, jnp.bfloat16
    B, _, T_origin = mix.shape
    C = params["enc_w2"].shape[0]
    D = n_spks * C
    stride = enc_k // 2
    L = (T_origin - enc_k) // stride + 1
    M = n_mem
    T_dec = (L + 1) * stride                  # == (L - 1) * stride + enc_k

    # Overlapping encoder frames, channels-last, batch folded onto sublanes.
    blocks = mix[:, 0, : stride * (L + 1)].reshape(B, L + 1, stride)
    frames = jnp.concatenate([blocks[:, :L, :], blocks[:, 1:, :]], axis=-1)
    frames = frames.reshape(B * L, enc_k).astype(f32)

    # ---- packed weight slabs (bf16, sublane-stacked, aligned row offsets) ----
    wq_scaled = params["wq"] * (1.0 / float(C) ** 0.5)        # fold attention scale
    packA = jnp.concatenate(
        [params["enc_w1"], params["enc_w2"], params["emb_w1"][:C],
         params["emb_w2"], wq_scaled], axis=0).astype(bf16)   # (enc_k+4C, C)
    offA = {"enc_w1": 0, "enc_w2": enc_k, "emb_w1x": enc_k + C,
            "emb_w2": enc_k + 2 * C, "wq": enc_k + 3 * C}

    wkv = jnp.concatenate([params["wk"], params["wv"]], axis=1)          # (C, 2C)
    if D > 2 * C:
        wkv = jnp.pad(wkv, ((0, 0), (0, D - 2 * C)))
    dec_w1_blk = _block_diag(params["dec_w1"], n_spks)                   # (D, D)
    packB = jnp.concatenate(
        [wkv, params["dis_w1"], params["dis_w2"], dec_w1_blk], axis=0).astype(bf16)
    offB = {"wkv": 0, "dis_w1": C, "dis_w2": 2 * C, "dec_w1": 2 * C + D}

    dect_blk = _block_diag(params["dect_w"], n_spks).astype(bf16)        # (D, n_spks*enc_k)

    # ---- bias / gamma / beta packs (f32) ----
    vecC = jnp.stack([params["enc_b1"], params["enc_in_g"], params["enc_in_b"],
                      params["enc_b2"], params["emb_b1"], params["emb_in_g"],
                      params["emb_in_b"], params["emb_b2"]], axis=0).astype(f32)
    vecD = jnp.stack([params["dis_b1"], params["dis_in_g"], params["dis_in_b"],
                      params["dis_b2"],
                      jnp.tile(params["dec_b1"], n_spks),
                      jnp.tile(params["dec_in_g"], n_spks),
                      jnp.tile(params["dec_in_b"], n_spks),
                      jnp.zeros((D,), f32)], axis=0).astype(f32)

    # memory_slots is a fixed buffer and batch independent: fold its embed
    # pre-activation (memslots @ emb_w1 + emb_b1) once (pure weight folding).
    h_mem_pre = (params["memory_slots"] @ params["emb_w1"]
                 + params["emb_b1"][None, :]).astype(f32)                # (M, C)

    scalars = jnp.stack([params["prelu_emb"], params["prelu_dis"]]).astype(f32)

    kernel = _make_kernel(B=B, L=L, M=M, C=C, enc_k=enc_k, n_spks=n_spks,
                          offA=offA, offB=offB)

    vmem = pl.BlockSpec(memory_space=pltpu.MemorySpace.VMEM)
    smem = pl.BlockSpec(memory_space=pltpu.MemorySpace.SMEM)
    out = pl.pallas_call(
        kernel,
        out_shape=jax.ShapeDtypeStruct((B * L, n_spks * enc_k), f32),
        in_specs=[vmem, vmem, vmem, vmem, vmem, vmem, vmem, smem],
        out_specs=vmem,
    )(frames, h_mem_pre, packA, packB, dect_blk, vecC, vecD, scalars)

    # ---- ConvTranspose1d overlap-add + bias in the XLA wrapper ----
    fr = out.reshape(B, L, n_spks, enc_k).transpose(0, 2, 1, 3)          # (B, S, L, k)
    lo, hi = fr[..., :stride], fr[..., stride:]
    z = jnp.zeros((B, n_spks, 1, stride), f32)
    est_blocks = (jnp.concatenate([lo, z], axis=2)
                  + jnp.concatenate([z, hi], axis=2)) + params["dect_b"]
    estimate = est_blocks.reshape(B, n_spks, T_dec)
    if T_origin > T_dec:
        estimate = jnp.pad(estimate, ((0, 0), (0, 0), (0, T_origin - T_dec)))
    else:
        estimate = estimate[:, :, :T_origin]
    return estimate


if __name__ == "__main__":
    B = 2
    C = 32          # encoder_out_nchannels
    n_spks = 2      # masknet_numspks
    n_mem = 8       # num_memory_slots
    enc_k = 16      # encoder_kernel_size (stride = 8)
    T = 136         # -> L = 16 encoder frames, decoder reconstructs exactly T samples

    key = jax.random.PRNGKey(0)
    k_in, k_par = jax.random.split(key)
    mix = jax.random.normal(k_in, (B, 1, T), jnp.float32)
    params = init_params(k_par, C=C, n_spks=n_spks, n_mem=n_mem, enc_k=enc_k)

    fwd = jax.jit(functools.partial(model_forward, enc_k=enc_k, n_spks=n_spks, n_mem=n_mem))
    est = fwd(mix, params)
    jax.block_until_ready(est)
    assert est.shape == (B, n_spks, T), est.shape
    assert bool(jnp.all(jnp.isfinite(est)))
    print("KERNEL_OK")
</pallas_src>

<mosaic_0001>
module attributes {stable_mosaic.version = 11 : i64} {
  func.func @kernel(%arg0: memref<32x16xf32, #tpu.memory_space<vmem>>, %arg1: memref<8x32xf32, #tpu.memory_space<vmem>>, %arg2: memref<144x32xbf16, #tpu.memory_space<vmem>>, %arg3: memref<192x64xbf16, #tpu.memory_space<vmem>>, %arg4: memref<64x32xbf16, #tpu.memory_space<vmem>>, %arg5: memref<8x32xf32, #tpu.memory_space<vmem>>, %arg6: memref<8x64xf32, #tpu.memory_space<vmem>>, %arg7: memref<2xf32, #tpu.memory_space<smem>>, %arg8: memref<32x32xf32, #tpu.memory_space<vmem>>) attributes {dimension_semantics = [], scalar_prefetch = 0 : i64, scratch_operands = 0 : i64, tpu.core_type = #tpu.core_type<tc>} {
    %c0 = arith.constant 0 : index
    %c0_0 = arith.constant 0 : index
    %0 = vector.load %arg0[%c0, %c0_0] : memref<32x16xf32, #tpu.memory_space<vmem>>, vector<32x16xf32>
    %1 = arith.truncf %0 : vector<32x16xf32> to vector<32x16xbf16>
    %c0_1 = arith.constant 0 : index
    %c0_2 = arith.constant 0 : index
    %2 = vector.load %arg2[%c0_1, %c0_2] : memref<144x32xbf16, #tpu.memory_space<vmem>>, vector<16x32xbf16>
    %cst = arith.constant dense<0.000000e+00> : vector<32x32xf32>
    %3 = tpu.matmul %1, %2, %cst {dimension_numbers = #tpu.dot_dimension_numbers<[1], [0], [0], [1], [0, 0, 1, 1], [], []>} : vector<32x16xbf16>, vector<16x32xbf16>, vector<32x32xf32> -> vector<32x32xf32>
    %c0_3 = arith.constant 0 : index
    %c0_4 = arith.constant 0 : index
    %4 = vector.load %arg5[%c0_3, %c0_4] : memref<8x32xf32, #tpu.memory_space<vmem>>, vector<1x32xf32>
    %5 = vector.broadcast %4 : vector<1x32xf32> to vector<32x32xf32>
    %6 = arith.addf %3, %5 : vector<32x32xf32>
    %c1 = arith.constant 1 : index
    %c0_5 = arith.constant 0 : index
    %7 = vector.load %arg5[%c1, %c0_5] : memref<8x32xf32, #tpu.memory_space<vmem>>, vector<1x32xf32>
    %c2 = arith.constant 2 : index
    %c0_6 = arith.constant 0 : index
    %8 = vector.load %arg5[%c2, %c0_6] : memref<8x32xf32, #tpu.memory_space<vmem>>, vector<1x32xf32>
    %9 = vector.shape_cast %6 : vector<32x32xf32> to vector<2x16x32xf32>
    %cst_7 = arith.constant dense<0.000000e+00> : vector<2x32xf32>
    %10 = vector.multi_reduction <add>, %9, %cst_7 [1] : vector<2x16x32xf32> to vector<2x32xf32>
    %11 = vector.shape_cast %10 : vector<2x32xf32> to vector<2x1x32xf32>
    %cst_8 = arith.constant 1.600000e+01 : f32
    %12 = vector.broadcast %cst_8 : f32 to vector<2x1x32xf32>
    %13 = arith.divf %11, %12 : vector<2x1x32xf32>
    %14 = vector.broadcast %13 : vector<2x1x32xf32> to vector<2x16x32xf32>
    %15 = arith.subf %9, %14 : vector<2x16x32xf32>
    %16 = arith.mulf %15, %15 : vector<2x16x32xf32>
    %cst_9 = arith.constant dense<0.000000e+00> : vector<2x32xf32>
    %17 = vector.multi_reduction <add>, %16, %cst_9 [1] : vector<2x16x32xf32> to vector<2x32xf32>
    %18 = vector.shape_cast %17 : vector<2x32xf32> to vector<2x1x32xf32>
    %cst_10 = arith.constant 1.600000e+01 : f32
    %19 = vector.broadcast %cst_10 : f32 to vector<2x1x32xf32>
    %20 = arith.divf %18, %19 : vector<2x1x32xf32>
    %cst_11 = arith.constant 9.99999974E-6 : f32
    %21 = vector.broadcast %cst_11 : f32 to vector<2x1x32xf32>
    %22 = arith.addf %20, %21 : vector<2x1x32xf32>
    %23 = math.rsqrt %22 : vector<2x1x32xf32>
    %24 = vector.broadcast %23 : vector<2x1x32xf32> to vector<2x16x32xf32>
    %25 = arith.mulf %15, %24 : vector<2x16x32xf32>
    %26 = vector.shape_cast %7 : vector<1x32xf32> to vector<1x1x32xf32>
    %27 = vector.broadcast %26 : vector<1x1x32xf32> to vector<2x16x32xf32>
    %28 = arith.mulf %25, %27 : vector<2x16x32xf32>
    %29 = vector.shape_cast %8 : vector<1x32xf32> to vector<1x1x32xf32>
    %30 = vector.broadcast %29 : vector<1x1x32xf32> to vector<2x16x32xf32>
    %31 = arith.addf %28, %30 : vector<2x16x32xf32>
    %cst_12 = arith.constant 0.000000e+00 : f32
    %32 = vector.broadcast %cst_12 : f32 to vector<2x16x32xf32>
    %33 = arith.cmpf oge, %31, %32 : vector<2x16x32xf32>
    %cst_13 = arith.constant 0.00999999977 : f32
    %34 = vector.broadcast %cst_13 : f32 to vector<2x16x32xf32>
    %35 = arith.mulf %31, %34 : vector<2x16x32xf32>
    %36 = arith.select %33, %31, %35 : vector<2x16x32xi1>, vector<2x16x32xf32>
    %37 = vector.shape_cast %36 : vector<2x16x32xf32> to vector<32x32xf32>
    %38 = arith.truncf %37 : vector<32x32xf32> to vector<32x32xbf16>
    %c16 = arith.constant 16 : index
    %c0_14 = arith.constant 0 : index
    %39 = vector.load %arg2[%c16, %c0_14] : memref<144x32xbf16, #tpu.memory_space<vmem>>, vector<32x32xbf16>
    %cst_15 = arith.constant dense<0.000000e+00> : vector<32x32xf32>
    %40 = tpu.matmul %38, %39, %cst_15 {dimension_numbers = #tpu.dot_dimension_numbers<[1], [0], [0], [1], [0, 0, 1, 1], [], []>} : vector<32x32xbf16>, vector<32x32xbf16>, vector<32x32xf32> -> vector<32x32xf32>
    %c3 = arith.constant 3 : index
    %c0_16 = arith.constant 0 : index
    %41 = vector.load %arg5[%c3, %c0_16] : memref<8x32xf32, #tpu.memory_space<vmem>>, vector<1x32xf32>
    %42 = vector.broadcast %41 : vector<1x32xf32> to vector<32x32xf32>
    %43 = arith.addf %40, %42 : vector<32x32xf32>
    %c0_17 = arith.constant 0 : index
    %44 = memref.load %arg7[%c0_17] : memref<2xf32, #tpu.memory_space<smem>>
    %45 = arith.truncf %43 : vector<32x32xf32> to vector<32x32xbf16>
    %c48 = arith.constant 48 : index
    %c0_18 = arith.constant 0 : index
    %46 = vector.load %arg2[%c48, %c0_18] : memref<144x32xbf16, #tpu.memory_space<vmem>>, vector<32x32xbf16>
    %cst_19 = arith.constant dense<0.000000e+00> : vector<32x32xf32>
    %47 = tpu.matmul %45, %46, %cst_19 {dimension_numbers = #tpu.dot_dimension_numbers<[1], [0], [0], [1], [0, 0, 1, 1], [], []>} : vector<32x32xbf16>, vector<32x32xbf16>, vector<32x32xf32> -> vector<32x32xf32>
    %c4 = arith.constant 4 : index
    %c0_20 = arith.constant 0 : index
    %48 = vector.load %arg5[%c4, %c0_20] : memref<8x32xf32, #tpu.memory_space<vmem>>, vector<1x32xf32>
    %49 = vector.broadcast %48 : vector<1x32xf32> to vector<32x32xf32>
    %50 = arith.addf %47, %49 : vector<32x32xf32>
    %c0_21 = arith.constant 0 : index
    %c0_22 = arith.constant 0 : index
    %51 = vector.load %arg1[%c0_21, %c0_22] : memref<8x32xf32, #tpu.memory_space<vmem>>, vector<8x32xf32>
    %52 = vector.shape_cast %50 : vector<32x32xf32> to vector<2x16x32xf32>
    %cst_23 = arith.constant dense<0.000000e+00> : vector<2x32xf32>
    %53 = vector.multi_reduction <add>, %52, %cst_23 [1] : vector<2x16x32xf32> to vector<2x32xf32>
    %cst_24 = arith.constant dense<0.000000e+00> : vector<32xf32>
    %54 = vector.multi_reduction <add>, %51, %cst_24 [0] : vector<8x32xf32> to vector<32xf32>
    %55 = vector.shape_cast %54 : vector<32xf32> to vector<1x32xf32>
    %56 = vector.broadcast %55 : vector<1x32xf32> to vector<2x32xf32>
    %57 = arith.addf %53, %56 : vector<2x32xf32>
    %cst_25 = arith.constant 0.0416666679 : f32
    %58 = vector.broadcast %cst_25 : f32 to vector<2x32xf32>
    %59 = arith.mulf %57, %58 : vector<2x32xf32>
    %60 = vector.shape_cast %59 : vector<2x32xf32> to vector<2x1x32xf32>
    %61 = vector.broadcast %60 : vector<2x1x32xf32> to vector<2x16x32xf32>
    %62 = arith.subf %52, %61 : vector<2x16x32xf32>
    %63 = vector.shape_cast %51 : vector<8x32xf32> to vector<1x8x32xf32>
    %64 = vector.shape_cast %59 : vector<2x32xf32> to vector<2x1x32xf32>
    %65 = vector.broadcast %63 : vector<1x8x32xf32> to vector<2x8x32xf32>
    %66 = vector.broadcast %64 : vector<2x1x32xf32> to vector<2x8x32xf32>
    %67 = arith.subf %65, %66 : vector<2x8x32xf32>
    %68 = arith.mulf %62, %62 : vector<2x16x32xf32>
    %cst_26 = arith.constant dense<0.000000e+00> : vector<2x32xf32>
    %69 = vector.multi_reduction <add>, %68, %cst_26 [1] : vector<2x16x32xf32> to vector<2x32xf32>
    %70 = arith.mulf %67, %67 : vector<2x8x32xf32>
    %cst_27 = arith.constant dense<0.000000e+00> : vector<2x32xf32>
    %71 = vector.multi_reduction <add>, %70, %cst_27 [1] : vector<2x8x32xf32> to vector<2x32xf32>
    %72 = arith.addf %69, %71 : vector<2x32xf32>
    %cst_28 = arith.constant 0.0416666679 : f32
    %73 = vector.broadcast %cst_28 : f32 to vector<2x32xf32>
    %74 = arith.mulf %72, %73 : vector<2x32xf32>
    %cst_29 = arith.constant 9.99999974E-6 : f32
    %75 = vector.broadcast %cst_29 : f32 to vector<2x32xf32>
    %76 = arith.addf %74, %75 : vector<2x32xf32>
    %77 = math.rsqrt %76 : vector<2x32xf32>
    %78 = vector.shape_cast %77 : vector<2x32xf32> to vector<2x1x32xf32>
    %c5 = arith.constant 5 : index
    %c0_30 = arith.constant 0 : index
    %79 = vector.load %arg5[%c5, %c0_30] : memref<8x32xf32, #tpu.memory_space<vmem>>, vector<1x32xf32>
    %80 = vector.shape_cast %79 : vector<1x32xf32> to vector<1x1x32xf32>
    %c6 = arith.constant 6 : index
    %c0_31 = arith.constant 0 : index
    %81 = vector.load %arg5[%c6, %c0_31] : memref<8x32xf32, #tpu.memory_space<vmem>>, vector<1x32xf32>
    %82 = vector.shape_cast %81 : vector<1x32xf32> to vector<1x1x32xf32>
    %83 = tpu.concatenate %62, %67 in 1 : vector<2x16x32xf32>, vector<2x8x32xf32> -> vector<2x24x32xf32>
    %84 = vector.broadcast %78 : vector<2x1x32xf32> to vector<2x24x32xf32>
    %85 = arith.mulf %83, %84 : vector<2x24x32xf32>
    %86 = vector.broadcast %80 : vector<1x1x32xf32> to vector<2x24x32xf32>
    %87 = arith.mulf %85, %86 : vector<2x24x32xf32>
    %88 = vector.broadcast %82 : vector<1x1x32xf32> to vector<2x24x32xf32>
    %89 = arith.addf %87, %88 : vector<2x24x32xf32>
    %cst_32 = arith.constant 0.000000e+00 : f32
    %90 = vector.broadcast %cst_32 : f32 to vector<2x24x32xf32>
    %91 = arith.cmpf oge, %89, %90 : vector<2x24x32xf32>
    %92 = vector.broadcast %44 : f32 to vector<2x24x32xf32>
    %93 = arith.mulf %89, %92 : vector<2x24x32xf32>
    %94 = arith.select %91, %89, %93 : vector<2x24x32xi1>, vector<2x24x32xf32>
    %95 = vector.shape_cast %94 : vector<2x24x32xf32> to vector<48x32xf32>
    %96 = arith.truncf %95 : vector<48x32xf32> to vector<48x32xbf16>
    %c80 = arith.constant 80 : index
    %c0_33 = arith.constant 0 : index
    %97 = vector.load %arg2[%c80, %c0_33] : memref<144x32xbf16, #tpu.memory_space<vmem>>, vector<32x32xbf16>
    %cst_34 = arith.constant dense<0.000000e+00> : vector<48x32xf32>
    %98 = tpu.matmul %96, %97, %cst_34 {dimension_numbers = #tpu.dot_dimension_numbers<[1], [0], [0], [1], [0, 0, 1, 1], [], []>} : vector<48x32xbf16>, vector<32x32xbf16>, vector<48x32xf32> -> vector<48x32xf32>
    %c7 = arith.constant 7 : index
    %c0_35 = arith.constant 0 : index
    %99 = vector.load %arg5[%c7, %c0_35] : memref<8x32xf32, #tpu.memory_space<vmem>>, vector<1x32xf32>
    %100 = vector.broadcast %99 : vector<1x32xf32> to vector<48x32xf32>
    %101 = arith.addf %98, %100 : vector<48x32xf32>
    %102 = vector.shape_cast %101 : vector<48x32xf32> to vector<2x24x32xf32>
    %103 = vector.extract_strided_slice %102 {offsets = [0, 0, 0], sizes = [2, 16, 32], strides = [1, 1, 1]} : vector<2x24x32xf32> to vector<2x16x32xf32>
    %104 = vector.extract_strided_slice %102 {offsets = [0, 16, 0], sizes = [2, 8, 32], strides = [1, 1, 1]} : vector<2x24x32xf32> to vector<2x8x32xf32>
    %105 = vector.shape_cast %103 : vector<2x16x32xf32> to vector<32x32xf32>
    %106 = arith.truncf %105 : vector<32x32xf32> to vector<32x32xbf16>
    %c112 = arith.constant 112 : index
    %c0_36 = arith.constant 0 : index
    %107 = vector.load %arg2[%c112, %c0_36] : memref<144x32xbf16, #tpu.memory_space<vmem>>, vector<32x32xbf16>
    %cst_37 = arith.constant dense<0.000000e+00> : vector<32x32xf32>
    %108 = tpu.matmul %106, %107, %cst_37 {dimension_numbers = #tpu.dot_dimension_numbers<[1], [0], [0], [1], [0, 0, 1, 1], [], []>} : vector<32x32xbf16>, vector<32x32xbf16>, vector<32x32xf32> -> vector<32x32xf32>
    %109 = vector.shape_cast %108 : vector<32x32xf32> to vector<2x16x32xf32>
    %110 = vector.shape_cast %104 : vector<2x8x32xf32> to vector<16x32xf32>
    %111 = arith.truncf %110 : vector<16x32xf32> to vector<16x32xbf16>
    %c0_38 = arith.constant 0 : index
    %c0_39 = arith.constant 0 : index
    %112 = vector.load %arg3[%c0_38, %c0_39] : memref<192x64xbf16, #tpu.memory_space<vmem>>, vector<32x64xbf16>
    %cst_40 = arith.constant dense<0.000000e+00> : vector<16x64xf32>
    %113 = tpu.matmul %111, %112, %cst_40 {dimension_numbers = #tpu.dot_dimension_numbers<[1], [0], [0], [1], [0, 0, 1, 1], [], []>} : vector<16x32xbf16>, vector<32x64xbf16>, vector<16x64xf32> -> vector<16x64xf32>
    %114 = vector.shape_cast %113 : vector<16x64xf32> to vector<2x8x64xf32>
    %115 = vector.extract_strided_slice %114 {offsets = [0, 0, 0], sizes = [2, 8, 32], strides = [1, 1, 1]} : vector<2x8x64xf32> to vector<2x8x32xf32>
    %116 = vector.extract_strided_slice %114 {offsets = [0, 0, 32], sizes = [2, 8, 32], strides = [1, 1, 1]} : vector<2x8x64xf32> to vector<2x8x32xf32>
    %117 = arith.truncf %109 : vector<2x16x32xf32> to vector<2x16x32xbf16>
    %118 = arith.truncf %115 : vector<2x8x32xf32> to vector<2x8x32xbf16>
    "tpu.trace_start"() <{level = 10 : i32, message = "blc,bmc->blm"}> : () -> ()
    %cst_41 = arith.constant dense<0.000000e+00> : vector<2x16x8xf32>
    %119 = tpu.matmul %117, %118, %cst_41 {dimension_numbers = #tpu.dot_dimension_numbers<[2], [2], [1], [1], [0, 0, 0, 1, 1, 1], [0], [0]>} : vector<2x16x32xbf16>, vector<2x8x32xbf16>, vector<2x16x8xf32> -> vector<2x16x8xf32>
    "tpu.trace_stop"() : () -> ()
    %cst_42 = arith.constant dense<0xFF800000> : vector<2x16xf32>
    %120 = vector.multi_reduction <maximumf>, %119, %cst_42 [2] : vector<2x16x8xf32> to vector<2x16xf32>
    %121 = vector.shape_cast %120 : vector<2x16xf32> to vector<2x16x1xf32>
    %122 = vector.broadcast %121 : vector<2x16x1xf32> to vector<2x16x8xf32>
    %123 = arith.subf %119, %122 : vector<2x16x8xf32>
    %124 = math.exp %123 : vector<2x16x8xf32>
    %cst_43 = arith.constant dense<0.000000e+00> : vector<2x16xf32>
    %125 = vector.multi_reduction <add>, %124, %cst_43 [2] : vector<2x16x8xf32> to vector<2x16xf32>
    %126 = vector.shape_cast %125 : vector<2x16xf32> to vector<2x16x1xf32>
    %127 = tpu.reciprocal %126 {approx = true} : vector<2x16x1xf32> -> vector<2x16x1xf32>
    %128 = vector.broadcast %127 : vector<2x16x1xf32> to vector<2x16x8xf32>
    %129 = arith.mulf %124, %128 : vector<2x16x8xf32>
    %130 = arith.truncf %129 : vector<2x16x8xf32> to vector<2x16x8xbf16>
    %131 = arith.truncf %116 : vector<2x8x32xf32> to vector<2x8x32xbf16>
    "tpu.trace_start"() <{level = 10 : i32, message = "blm,bmc->blc"}> : () -> ()
    %cst_44 = arith.constant dense<0.000000e+00> : vector<2x16x32xf32>
    %132 = tpu.matmul %130, %131, %cst_44 {dimension_numbers = #tpu.dot_dimension_numbers<[2], [1], [1], [2], [0, 0, 0, 1, 1, 2], [0], [0]>} : vector<2x16x8xbf16>, vector<2x8x32xbf16>, vector<2x16x32xf32> -> vector<2x16x32xf32>
    "tpu.trace_stop"() : () -> ()
    %133 = arith.addf %103, %132 : vector<2x16x32xf32>
    %134 = vector.shape_cast %133 : vector<2x16x32xf32> to vector<32x32xf32>
    %c1_45 = arith.constant 1 : index
    %135 = memref.load %arg7[%c1_45] : memref<2xf32, #tpu.memory_space<smem>>
    %136 = arith.truncf %134 : vector<32x32xf32> to vector<32x32xbf16>
    %c32 = arith.constant 32 : index
    %c0_46 = arith.constant 0 : index
    %137 = vector.load %arg3[%c32, %c0_46] : memref<192x64xbf16, #tpu.memory_space<vmem>>, vector<32x64xbf16>
    %cst_47 = arith.constant dense<0.000000e+00> : vector<32x64xf32>
    %138 = tpu.matmul %136, %137, %cst_47 {dimension_numbers = #tpu.dot_dimension_numbers<[1], [0], [0], [1], [0, 0, 1, 1], [], []>} : vector<32x32xbf16>, vector<32x64xbf16>, vector<32x64xf32> -> vector<32x64xf32>
    %c0_48 = arith.constant 0 : index
    %c0_49 = arith.constant 0 : index
    %139 = vector.load %arg6[%c0_48, %c0_49] : memref<8x64xf32, #tpu.memory_space<vmem>>, vector<1x64xf32>
    %140 = vector.broadcast %139 : vector<1x64xf32> to vector<32x64xf32>
    %141 = arith.addf %138, %140 : vector<32x64xf32>
    %c1_50 = arith.constant 1 : index
    %c0_51 = arith.constant 0 : index
    %142 = vector.load %arg6[%c1_50, %c0_51] : memref<8x64xf32, #tpu.memory_space<vmem>>, vector<1x64xf32>
    %c2_52 = arith.constant 2 : index
    %c0_53 = arith.constant 0 : index
    %143 = vector.load %arg6[%c2_52, %c0_53] : memref<8x64xf32, #tpu.memory_space<vmem>>, vector<1x64xf32>
    %144 = vector.shape_cast %141 : vector<32x64xf32> to vector<2x16x64xf32>
    %cst_54 = arith.constant dense<0.000000e+00> : vector<2x64xf32>
    %145 = vector.multi_reduction <add>, %144, %cst_54 [1] : vector<2x16x64xf32> to vector<2x64xf32>
    %146 = vector.shape_cast %145 : vector<2x64xf32> to vector<2x1x64xf32>
    %cst_55 = arith.constant 1.600000e+01 : f32
    %147 = vector.broadcast %cst_55 : f32 to vector<2x1x64xf32>
    %148 = arith.divf %146, %147 : vector<2x1x64xf32>
    %149 = vector.broadcast %148 : vector<2x1x64xf32> to vector<2x16x64xf32>
    %150 = arith.subf %144, %149 : vector<2x16x64xf32>
    %151 = arith.mulf %150, %150 : vector<2x16x64xf32>
    %cst_56 = arith.constant dense<0.000000e+00> : vector<2x64xf32>
    %152 = vector.multi_reduction <add>, %151, %cst_56 [1] : vector<2x16x64xf32> to vector<2x64xf32>
    %153 = vector.shape_cast %152 : vector<2x64xf32> to vector<2x1x64xf32>
    %cst_57 = arith.constant 1.600000e+01 : f32
    %154 = vector.broadcast %cst_57 : f32 to vector<2x1x64xf32>
    %155 = arith.divf %153, %154 : vector<2x1x64xf32>
    %cst_58 = arith.constant 9.99999974E-6 : f32
    %156 = vector.broadcast %cst_58 : f32 to vector<2x1x64xf32>
    %157 = arith.addf %155, %156 : vector<2x1x64xf32>
    %158 = math.rsqrt %157 : vector<2x1x64xf32>
    %159 = vector.broadcast %158 : vector<2x1x64xf32> to vector<2x16x64xf32>
    %160 = arith.mulf %150, %159 : vector<2x16x64xf32>
    %161 = vector.shape_cast %142 : vector<1x64xf32> to vector<1x1x64xf32>
    %162 = vector.broadcast %161 : vector<1x1x64xf32> to vector<2x16x64xf32>
    %163 = arith.mulf %160, %162 : vector<2x16x64xf32>
    %164 = vector.shape_cast %143 : vector<1x64xf32> to vector<1x1x64xf32>
    %165 = vector.broadcast %164 : vector<1x1x64xf32> to vector<2x16x64xf32>
    %166 = arith.addf %163, %165 : vector<2x16x64xf32>
    %cst_59 = arith.constant 0.000000e+00 : f32
    %167 = vector.broadcast %cst_59 : f32 to vector<2x16x64xf32>
    %168 = arith.cmpf oge, %166, %167 : vector<2x16x64xf32>
    %169 = vector.broadcast %135 : f32 to vector<2x16x64xf32>
    %170 = arith.mulf %166, %169 : vector<2x16x64xf32>
    %171 = arith.select %168, %166, %170 : vector<2x16x64xi1>, vector<2x16x64xf32>
    %172 = vector.shape_cast %171 : vector<2x16x64xf32> to vector<32x64xf32>
    %173 = arith.truncf %172 : vector<32x64xf32> to vector<32x64xbf16>
    %c64 = arith.constant 64 : index
    %c0_60 = arith.constant 0 : index
    %174 = vector.load %arg3[%c64, %c0_60] : memref<192x64xbf16, #tpu.memory_space<vmem>>, vector<64x64xbf16>
    %cst_61 = arith.constant dense<0.000000e+00> : vector<32x64xf32>
    %175 = tpu.matmul %173, %174, %cst_61 {dimension_numbers = #tpu.dot_dimension_numbers<[1], [0], [0], [1], [0, 0, 1, 1], [], []>} : vector<32x64xbf16>, vector<64x64xbf16>, vector<32x64xf32> -> vector<32x64xf32>
    %c3_62 = arith.constant 3 : index
    %c0_63 = arith.constant 0 : index
    %176 = vector.load %arg6[%c3_62, %c0_63] : memref<8x64xf32, #tpu.memory_space<vmem>>, vector<1x64xf32>
    %177 = vector.broadcast %176 : vector<1x64xf32> to vector<32x64xf32>
    %178 = arith.addf %175, %177 : vector<32x64xf32>
    %179 = math.tanh %178 : vector<32x64xf32>
    %180 = tpu.concatenate %43, %43 in 1 : vector<32x32xf32>, vector<32x32xf32> -> vector<32x64xf32>
    %181 = arith.mulf %180, %179 : vector<32x64xf32>
    %182 = arith.truncf %181 : vector<32x64xf32> to vector<32x64xbf16>
    %c128 = arith.constant 128 : index
    %c0_64 = arith.constant 0 : index
    %183 = vector.load %arg3[%c128, %c0_64] : memref<192x64xbf16, #tpu.memory_space<vmem>>, vector<64x64xbf16>
    %cst_65 = arith.constant dense<0.000000e+00> : vector<32x64xf32>
    %184 = tpu.matmul %182, %183, %cst_65 {dimension_numbers = #tpu.dot_dimension_numbers<[1], [0], [0], [1], [0, 0, 1, 1], [], []>} : vector<32x64xbf16>, vector<64x64xbf16>, vector<32x64xf32> -> vector<32x64xf32>
    %c4_66 = arith.constant 4 : index
    %c0_67 = arith.constant 0 : index
    %185 = vector.load %arg6[%c4_66, %c0_67] : memref<8x64xf32, #tpu.memory_space<vmem>>, vector<1x64xf32>
    %186 = vector.broadcast %185 : vector<1x64xf32> to vector<32x64xf32>
    %187 = arith.addf %184, %186 : vector<32x64xf32>
    %c5_68 = arith.constant 5 : index
    %c0_69 = arith.constant 0 : index
    %188 = vector.load %arg6[%c5_68, %c0_69] : memref<8x64xf32, #tpu.memory_space<vmem>>, vector<1x64xf32>
    %c6_70 = arith.constant 6 : index
    %c0_71 = arith.constant 0 : index
    %189 = vector.load %arg6[%c6_70, %c0_71] : memref<8x64xf32, #tpu.memory_space<vmem>>, vector<1x64xf32>
    %190 = vector.shape_cast %187 : vector<32x64xf32> to vector<2x16x64xf32>
    %cst_72 = arith.constant dense<0.000000e+00> : vector<2x64xf32>
    %191 = vector.multi_reduction <add>, %190, %cst_72 [1] : vector<2x16x64xf32> to vector<2x64xf32>
    %192 = vector.shape_cast %191 : vector<2x64xf32> to vector<2x1x64xf32>
    %cst_73 = arith.constant 1.600000e+01 : f32
    %193 = vector.broadcast %cst_73 : f32 to vector<2x1x64xf32>
    %194 = arith.divf %192, %193 : vector<2x1x64xf32>
    %195 = vector.broadcast %194 : vector<2x1x64xf32> to vector<2x16x64xf32>
    %196 = arith.subf %190, %195 : vector<2x16x64xf32>
    %197 = arith.mulf %196, %196 : vector<2x16x64xf32>
    %cst_74 = arith.constant dense<0.000000e+00> : vector<2x64xf32>
    %198 = vector.multi_reduction <add>, %197, %cst_74 [1] : vector<2x16x64xf32> to vector<2x64xf32>
    %199 = vector.shape_cast %198 : vector<2x64xf32> to vector<2x1x64xf32>
    %cst_75 = arith.constant 1.600000e+01 : f32
    %200 = vector.broadcast %cst_75 : f32 to vector<2x1x64xf32>
    %201 = arith.divf %199, %200 : vector<2x1x64xf32>
    %cst_76 = arith.constant 9.99999974E-6 : f32
    %202 = vector.broadcast %cst_76 : f32 to vector<2x1x64xf32>
    %203 = arith.addf %201, %202 : vector<2x1x64xf32>
    %204 = math.rsqrt %203 : vector<2x1x64xf32>
    %205 = vector.broadcast %204 : vector<2x1x64xf32> to vector<2x16x64xf32>
    %206 = arith.mulf %196, %205 : vector<2x16x64xf32>
    %207 = vector.shape_cast %188 : vector<1x64xf32> to vector<1x1x64xf32>
    %208 = vector.broadcast %207 : vector<1x1x64xf32> to vector<2x16x64xf32>
    %209 = arith.mulf %206, %208 : vector<2x16x64xf32>
    %210 = vector.shape_cast %189 : vector<1x64xf32> to vector<1x1x64xf32>
    %211 = vector.broadcast %210 : vector<1x1x64xf32> to vector<2x16x64xf32>
    %212 = arith.addf %209, %211 : vector<2x16x64xf32>
    %cst_77 = arith.constant 0.000000e+00 : f32
    %213 = vector.broadcast %cst_77 : f32 to vector<2x16x64xf32>
    %214 = arith.cmpf oge, %212, %213 : vector<2x16x64xf32>
    %cst_78 = arith.constant 0.00999999977 : f32
    %215 = vector.broadcast %cst_78 : f32 to vector<2x16x64xf32>
    %216 = arith.mulf %212, %215 : vector<2x16x64xf32>
    %217 = arith.select %214, %212, %216 : vector<2x16x64xi1>, vector<2x16x64xf32>
    %218 = vector.shape_cast %217 : vector<2x16x64xf32> to vector<32x64xf32>
    %219 = arith.truncf %218 : vector<32x64xf32> to vector<32x64xbf16>
    %c0_79 = arith.constant 0 : index
    %c0_80 = arith.constant 0 : index
    %220 = vector.load %arg4[%c0_79, %c0_80] : memref<64x32xbf16, #tpu.memory_space<vmem>>, vector<64x32xbf16>
    %cst_81 = arith.constant dense<0.000000e+00> : vector<32x32xf32>
    %221 = tpu.matmul %219, %220, %cst_81 {dimension_numbers = #tpu.dot_dimension_numbers<[1], [0], [0], [1], [0, 0, 1, 1], [], []>} : vector<32x64xbf16>, vector<64x32xbf16>, vector<32x32xf32> -> vector<32x32xf32>
    %c0_82 = arith.constant 0 : index
    %c0_83 = arith.constant 0 : index
    %222 = vector.load %arg8[%c0_82, %c0_83] : memref<32x32xf32, #tpu.memory_space<vmem>>, vector<32x32xf32>
    tpu.vector_store %arg8[%c0_82, %c0_83], %221 {strides = array<i32>} : memref<32x32xf32, #tpu.memory_space<vmem>>, vector<32x32xf32>,
    return
  }
}

</mosaic_0001>

<llo_original>
// kernel: squeeze.1
$region0: #{squeeze.1}
  %s0 = inlined_call_operand.vmem [shape: f32[2,136], index: 0, kind: input, shape index: {}]
  %s1 = inlined_call_operand.vmem [shape: f32[2,17,8], index: 1, kind: output, shape index: {}]
  $region1: #{squeeze.1} parent=0
    #allocation0 [shape = 'u8[8192]{0}', space=vmem, size = 0x2000, scoped, tag = 'scoped mem for input reshape']
    %s3 = sshllo.u32 0, 2
    %s4 = scalar_lea.vmem %s0, 2
    %v5 = vld [vmem:[%s4] sm:%s3]
    %s6 = scalar_lea.vmem [#allocation0], 8
    %7 = vst [vmem:[%s6] sm:%s3] %v5
    %v8 = vld [vmem:[%s0] sm:%s3]
    %9 = vst [vmem:[#allocation0] sm:%s3] %v8
    %v10 = vld [vmem:[#allocation0] sm:$0x3]
    %vm11 = vcmask 64512
    %12 = vst.msk [vmem:[%s1] ss:$24 sm:$0x3] %vm11, %v10
    %s13 = scalar_lea.vmem [#allocation0], 8
    %v14 = vld [vmem:[%s13] sm:$0x3]
    %vm15 = vcmask 64512
    %s16 = scalar_lea.vmem %s1, 16
    %17 = vst.msk [vmem:[%s16] ss:$24 sm:$0x3] %vm15, %v14
    %v18 = vld [vmem:[#allocation0] sm:$0x3]
    %19 = vrot.lane.b32.xlu0 %v18, 120
    %v20 = vpop.permute.xlu0 %19
    %vm21 = vcmask 64512
    %s22 = scalar_lea.vmem %s1, 1
    %23 = vst.msk [vmem:[%s22] ss:$24 sm:$0x3] %vm21, %v20
    %v24 = vld [vmem:[#allocation0] sm:$0x3]
    %25 = vrot.lane.b32.xlu0 %v24, 112
    %v26 = vpop.permute.xlu0 %25
    %vm27 = vcmask 64512
    %s28 = scalar_lea.vmem %s1, 2
    %29 = vst.msk [vmem:[%s28] ss:$24 sm:$0x3] %vm27, %v26
    %v30 = vld [vmem:[#allocation0] sm:$0x3]
    %31 = vrot.lane.b32.xlu0 %v30, 104
    %v32 = vpop.permute.xlu0 %31
    %vm33 = vcmask 64512
    %s34 = scalar_lea.vmem %s1, 3
    %35 = vst.msk [vmem:[%s34] ss:$24 sm:$0x3] %vm33, %v32
    %v36 = vld [vmem:[#allocation0] sm:$0x3]
    %37 = vrot.lane.b32.xlu0 %v36, 96
    %v38 = vpop.permute.xlu0 %37
    %vm39 = vcmask 64512
    %s40 = scalar_lea.vmem %s1, 4
    %41 = vst.msk [vmem:[%s40] ss:$24 sm:$0x3] %vm39, %v38
    %v42 = vld [vmem:[#allocation0] sm:$0x3]
    %43 = vrot.lane.b32.xlu0 %v42, 88
    %v44 = vpop.permute.xlu0 %43
    %vm45 = vcmask 64512
    %s46 = scalar_lea.vmem %s1, 5
    %47 = vst.msk [vmem:[%s46] ss:$24 sm:$0x3] %vm45, %v44
    %v48 = vld [vmem:[#allocation0] sm:$0x3]
    %49 = vrot.lane.b32.xlu0 %v48, 80
    %v50 = vpop.permute.xlu0 %49
    %vm51 = vcmask 64512
    %s52 = scalar_lea.vmem %s1, 6
    %53 = vst.msk [vmem:[%s52] ss:$24 sm:$0x3] %vm51, %v50
    %v54 = vld [vmem:[#allocation0] sm:$0x3]
    %55 = vrot.lane.b32.xlu0 %v54, 72
    %v56 = vpop.permute.xlu0 %55
    %vm57 = vcmask 64512
    %s58 = scalar_lea.vmem %s1, 7
    %59 = vst.msk [vmem:[%s58] ss:$24 sm:$0x3] %vm57, %v56
    %s60 = scalar_lea.vmem [#allocation0], 1
    %s61 = smov 3
    %v62 = vld [vmem:[%s60] ss:$-1 sm:%s61]
    %63 = vrot.lane.b32.xlu0 %v62, 64
    %v64 = vpop.permute.xlu0 %63
    %vm65 = vcmask 64512
    %s66 = scalar_lea.vmem %s1, 32
    %67 = vst.msk [vmem:[%s66] ss:$-24 sm:$0x3] %vm65, %v64
    %s68 = scalar_lea.vmem [#allocation0], 1
    %s69 = smov 3
    %v70 = vld [vmem:[%s68] ss:$-1 sm:%s69]
    %71 = vrot.lane.b32.xlu0 %v70, 56
    %v72 = vpop.permute.xlu0 %71
    %vm73 = vcmask 64512
    %s74 = scalar_lea.vmem %s1, 33
    %75 = vst.msk [vmem:[%s74] ss:$-24 sm:$0x3] %vm73, %v72
    %s76 = scalar_lea.vmem [#allocation0], 1
    %s77 = smov 3
    %v78 = vld [vmem:[%s76] ss:$-1 sm:%s77]
    %79 = vrot.lane.b32.xlu0 %v78, 48
    %v80 = vpop.permute.xlu0 %79
    %vm81 = vcmask 64512
    %s82 = scalar_lea.vmem %s1, 34
    %83 = vst.msk [vmem:[%s82] ss:$-24 sm:$0x3] %vm81, %v80
    %s84 = scalar_lea.vmem [#allocation0], 1
    %s85 = smov 3
    %v86 = vld [vmem:[%s84] ss:$-1 sm:%s85]
    %87 = vrot.lane.b32.xlu0 %v86, 40
    %v88 = vpop.permute.xlu0 %87
    %vm89 = vcmask 64512
    %s90 = scalar_lea.vmem %s1, 35
    %91 = vst.msk [vmem:[%s90] ss:$-24 sm:$0x3] %vm89, %v88
    %s92 = scalar_lea.vmem [#allocation0], 1
    %s93 = smov 3
    %v94 = vld [vmem:[%s92] ss:$-1 sm:%s93]
    %95 = vrot.lane.b32.xlu0 %v94, 32
    %v96 = vpop.permute.xlu0 %95
    %vm97 = vcmask 64512
    %s98 = scalar_lea.vmem %s1, 36
    %99 = vst.msk [vmem:[%s98] ss:$-24 sm:$0x3] %vm97, %v96
    %s100 = scalar_lea.vmem [#allocation0], 1
    %s101 = smov 3
    %v102 = vld [vmem:[%s100] ss:$-1 sm:%s101]
    %103 = vrot.lane.b32.xlu0 %v102, 24
    %v104 = vpop.permute.xlu0 %103
    %vm105 = vcmask 64512
    %s106 = scalar_lea.vmem %s1, 37
    %107 = vst.msk [vmem:[%s106] ss:$-24 sm:$0x3] %vm105, %v104
    %s108 = scalar_lea.vmem [#allocation0], 1
    %s109 = smov 3
    %v110 = vld [vmem:[%s108] ss:$-1 sm:%s109]
    %111 = vrot.lane.b32.xlu0 %v110, 16
    %v112 = vpop.permute.xlu0 %111
    %vm113 = vcmask 64512
    %s114 = scalar_lea.vmem %s1, 38
    %115 = vst.msk [vmem:[%s114] ss:$-24 sm:$0x3] %vm113, %v112
    %s116 = scalar_lea.vmem [#allocation0], 1
    %s117 = smov 3
    %v118 = vld [vmem:[%s116] ss:$-1 sm:%s117]
    %119 = vrot.lane.b32.xlu0 %v118, 8
    %v120 = vpop.permute.xlu0 %119
    %vm121 = vcmask 64512
    %s122 = scalar_lea.vmem %s1, 39
    %123 = vst.msk [vmem:[%s122] ss:$-24 sm:$0x3] %vm121, %v120

// kernel: tile.18
$region0: #{tile.18}
  #allocation0 [shape = 's32[1]{0}', space=sflag, size = 0x4, scoped, tag = 'scoped memory for tile.18']
  %s0 = inlined_call_operand.vmem [shape: f32[32], index: 0, kind: input, shape index: {}]
  %s1 = inlined_call_operand.vmem [shape: f32[2,32], index: 1, kind: output, shape index: {}]
  // Predicated region
  $region2: #{tile.18} parent=0 // pred_check
    _
  $region3: #{tile.18} parent=0 // pred_check_branch
    %3 = sbr.rel (0) target = $region5
  $region4: #{tile.18} parent=0 // pred_region
    _
  $region5: #{tile.18} parent=0 // pred_fallthru
    _
  %v4 = vld [vmem:[%s0] ss:$0 sm:$0xff]
  %5 = vst [vmem:[%s1] sm:$0x3] %v4

// kernel: tile.27
$region0: #{tile.27}
  %s0 = inlined_call_operand.vmem [shape: f32[2,32], index: 0, kind: input, shape index: {}]
  %s1 = inlined_call_operand.vmem [shape: f32[1,64], index: 1, kind: output, shape index: {}]
  $region1: #{tile.27} parent=0
    #allocation0 [shape = 'u8[4096]{0}', space=vmem, size = 0x1000, scoped, tag = 'scoped mem for output reshape']
    #allocation1 [shape = 'u8[4096]{0}', space=vmem, size = 0x1000, scoped, tag = 'scoped mem for input reshape']
    %s3 = sshllo.u32 0, 2
    %v4 = vld [vmem:[%s0] sm:%s3]
    %5 = vst [vmem:[#allocation1] sm:%s3] %v4
    %v6 = vld [vmem:[#allocation1] sm:$0x1]
    %vm7 = vcmask 261120
    %8 = vst.msk [vmem:[#allocation0] sm:$0x1] %vm7, %v6
    %s9 = scalar_lea.vmem [#allocation1], 1
    %v10 = vld [vmem:[%s9] sm:$0x1]
    %11 = vrot.lane.b32.xlu0 %v10, 32
    %v12 = vpop.permute.xlu0 %11
    %vm13 = vcmask 523520
    %14 = vst.msk [vmem:[#allocation0] sm:$0x1] %vm13, %v12
    %s16 = sshllo.u32 0, 1
    %v18 = vld [vmem:[#allocation0] sm:%s16]
    %s19 = sshllo.u32 0, 1
    %20 = vst [vmem:[%s1] sm:%s19] %v18

// kernel: model_forward.1
$region0: #{model_forward.1}
  #allocation0 [shape = 'u32[]', space=smem, size = 0x4, offset = 0x4, fixed_abs, tag = 'smem constant byte address 0x4 - core index']
  #allocation1 [shape = 'u32[144,128]{1,0:T(1,128)}', space=vmem, size = 0x12000, scoped, tag = 'internal scratch']
  %s0 = inlined_call_operand.vmem [shape: f32[32,16], index: 0, kind: input, shape index: {}]
  %s1 = inlined_call_operand.vmem [shape: f32[8,32], index: 1, kind: input, shape index: {}]
  %s2 = inlined_call_operand.vmem [shape: bf16[144,32], index: 2, kind: input, shape index: {}]
  %s3 = inlined_call_operand.vmem [shape: bf16[192,64], index: 3, kind: input, shape index: {}]
  %s4 = inlined_call_operand.vmem [shape: bf16[64,32], index: 4, kind: input, shape index: {}]
  %s5 = inlined_call_operand.vmem [shape: f32[8,32], index: 5, kind: input, shape index: {}]
  %s6 = inlined_call_operand.vmem [shape: f32[8,64], index: 6, kind: input, shape index: {}]
  %s7 = inlined_call_operand.vmem [shape: f32[2], index: 7, kind: input, shape index: {}]
  %s8 = inlined_call_operand.vmem [shape: f32[32,32], index: 8, kind: output, shape index: {}]
  %s9 = sld [smem:[#allocation0]]
  $region46: #{model_forward.1} parent=0
    _
  %s11 = ssub.s32 1, %s9
  %s12 = scalar_select 0, %s11, %s9
  $region1: #{model_forward.1} parent=0
    #allocation2 [shape = 'u8[512]{0}', space=smem, size = 0x200, scoped, tag = 'input window, operand 7, single buffered']
    #allocation3 [shape = 's32[1]{0}', space=sflag, size = 0x4, scoped, tag = 'scoped memory for model_forward.1']
    %13 = vsyncpa [#allocation3], 0
    // Predicated region
    $region2: #{model_forward.1} parent=1 // pred_check
      _
    $region3: #{model_forward.1} parent=1 // pred_check_branch
      %15 = sbr.rel (0) target = $region5
    $region4: #{model_forward.1} parent=1 // pred_region
      _
    $region5: #{model_forward.1} parent=1 // pred_fallthru
      _
    // Predicated region
    $region6: #{model_forward.1} parent=1 // pred_check
      _
    $region7: #{model_forward.1} parent=1 // pred_check_branch
      %17 = sbr.rel (0) target = $region9
    $region8: #{model_forward.1} parent=1 // pred_region
      _
    $region9: #{model_forward.1} parent=1 // pred_fallthru
      _
    // Predicated region
    $region10: #{model_forward.1} parent=1 // pred_check
      _
    $region11: #{model_forward.1} parent=1 // pred_check_branch
      %19 = sbr.rel (0) target = $region13
    $region12: #{model_forward.1} parent=1 // pred_region
      _
    $region13: #{model_forward.1} parent=1 // pred_fallthru
      _
    // Predicated region
    $region14: #{model_forward.1} parent=1 // pred_check
      _
    $region15: #{model_forward.1} parent=1 // pred_check_branch
      %21 = sbr.rel (0) target = $region17
    $region16: #{model_forward.1} parent=1 // pred_region
      _
    $region17: #{model_forward.1} parent=1 // pred_fallthru
      _
    // Predicated region
    $region18: #{model_forward.1} parent=1 // pred_check
      _
    $region19: #{model_forward.1} parent=1 // pred_check_branch
      %23 = sbr.rel (0) target = $region21
    $region20: #{model_forward.1} parent=1 // pred_region
      _
    $region21: #{model_forward.1} parent=1 // pred_fallthru
      _
    // Predicated region
    $region22: #{model_forward.1} parent=1 // pred_check
      _
    $region23: #{model_forward.1} parent=1 // pred_check_branch
      %25 = sbr.rel (0) target = $region25
    $region24: #{model_forward.1} parent=1 // pred_region
      _
    $region25: #{model_forward.1} parent=1 // pred_fallthru
      _
    // Predicated region
    $region26: #{model_forward.1} parent=1 // pred_check
      _
    $region27: #{model_forward.1} parent=1 // pred_check_branch
      %27 = sbr.rel (0) target = $region29
    $region28: #{model_forward.1} parent=1 // pred_region
      _
    $region29: #{model_forward.1} parent=1 // pred_fallthru
      _
    // Predicated region
    $region30: #{model_forward.1} parent=1 // pred_check
      _
    $region31: #{model_forward.1} parent=1 // pred_check_branch
      %29 = sbr.rel (0) target = $region33
    $region32: #{model_forward.1} parent=1 // pred_region
      %s31 = ssub.s32 16, 16
      %32 = vsyncadd [#allocation3], %s31
      %s34 = sshll.u32 %s7, 4
      %s35 = int_to_ptr.vmem [resolvable:$true] %s34
      %37 = dma.vmem_to_smem %s35, 16, [#allocation2], [#allocation3]
    $region33: #{model_forward.1} parent=1 // pred_fallthru
      _
    // Predicated region
    $region34: #{model_forward.1} parent=1 // pred_check
      _
    $region35: #{model_forward.1} parent=1 // pred_check_branch
      %39 = sbr.rel (0) target = $region37
    $region36: #{model_forward.1} parent=1 // pred_region
      %40 = dma.done [#allocation3], 16
    $region37: #{model_forward.1} parent=1 // pred_fallthru
      _
    %41 = sfence
    %v43 = vld [vmem:[%s0] sm:$0xff]
    %v44 = vld [vmem:[%s0 + $0x8] sm:$0xff]
    %v45 = vld [vmem:[%s0 + $0x10] sm:$0xff]
    %v46 = vld [vmem:[%s0 + $0x18] sm:$0xff]
    %v47 = vpack.c.bf16 %v44, %v43
    %v48 = vpack.c.bf16 %v46, %v45
    %v49 = vld [vmem:[%s2] sm:$0xf]
    %v50 = vld [vmem:[%s2 + $0x4] sm:$0xf]
    %v51 = vld [vmem:[%s5] sm:$0x1]
    %v52 = vlaneseq
    %v53 = vshrl.u32 %v52, 7
    %v54 = vsub.s32 0, %v53
    %v55 = vrot.slane %v51, %v54
    %v58 = vunpack.c.l.b16 %v49
    %v59 = vunpack.c.l.b16 %v50
    %v60 = vpack.c.b16 %v59, %v58
    %vm62 = vcmask 130048
    %v64 = vsel %vm62, %v47, 0
    %v67 = vsel %vm62, %v48, 0
    %69 = vmatprep.subr.bf16.mxu0 0
    %70 = vmatpush1.bf16.msra.mxu0 %v60
    %71 = vmatprep.subr.bf16.mxu0 0
    %72 = vmatpush1.bf16.msra.mxu0 0
    %73 = vmatprep.subr.bf16.mxu0 0
    %74 = vmatpush1.bf16.msra.mxu0 0
    %75 = vmatprep.subr.bf16.mxu0 0
    %76 = vmatpush1.bf16.msra.mxu0 0
    %77 = vmatprep.subr.bf16.mxu0 0
    %78 = vmatpush1.bf16.msra.mxu0 0
    %79 = vmatprep.subr.bf16.mxu0 0
    %80 = vmatpush1.bf16.msra.mxu0 0
    %81 = vmatprep.subr.bf16.mxu0 0
    %82 = vmatpush1.bf16.msra.mxu0 0
    %83 = vmatprep.subr.bf16.mxu0 0
    %84 = vmatpush1.bf16.msra.mxu0 0
    %85 = vmatprep.subr.bf16.mxu0 0
    %86 = vmatpush1.bf16.msra.mxu0 0
    %87 = vmatprep.subr.bf16.mxu0 0
    %88 = vmatpush1.bf16.msra.mxu0 0
    %89 = vmatprep.subr.bf16.mxu0 0
    %90 = vmatpush1.bf16.msra.mxu0 0
    %91 = vmatprep.subr.bf16.mxu0 0
    %92 = vmatpush1.bf16.msra.mxu0 0
    %93 = vmatprep.subr.bf16.mxu0 0
    %94 = vmatpush1.bf16.msra.mxu0 0
    %95 = vmatprep.subr.bf16.mxu0 0
    %96 = vmatpush1.bf16.msra.mxu0 0
    %97 = vmatprep.subr.bf16.mxu0 0
    %98 = vmatpush1.bf16.msra.mxu0 0
    %99 = vmatprep.subr.bf16.mxu0 0
    %100 = vmatpush1.bf16.msra.mxu0 0
    %101 = vmatprep.mubr.bf16.mxu0 0
    %102 = vmatmul.mubr.bf16.gmra.mrb[0].mxu0 %v64
    %v103 = vpop.f32.mrb[0].mxu0
    %v104 = vadd.f32 %v55, %v103
    %v105 = vpop.f32.mrb[0].mxu0
    %v106 = vpop.f32.mrb[0].mxu0
    %v107 = vadd.f32 %v55, %v106
    %v108 = vpop.f32.mrb[0].mxu0
    %109 = vmatprep.mubr.bf16.mxu0 0
    %110 = vmatmul.mubr.bf16.gmra.mrb[0].mxu0 %v67
    %v111 = vpop.f32.mrb[0].mxu0
    %v112 = vadd.f32 %v55, %v111
    %v113 = vpop.f32.mrb[0].mxu0
    %v114 = vpop.f32.mrb[0].mxu0
    %v115 = vadd.f32 %v55, %v114
    %v116 = vpop.f32.mrb[0].mxu0
    %117 = vdwg.mxu0
    %v118 = vld [vmem:[%s5 + $0x1] sm:$0x1]
    %v119 = vld [vmem:[%s5 + $0x2] sm:$0x1]
    %vm120 = vcmask 261120
    %v121 = vsel %vm120, %v104, 0.0
    %v122 = vsel %vm120, %v107, 0.0
    %v123 = vadd.f32 %v121, %v122
    %v124 = vrot.slane %v123, 4
    %v125 = vadd.f32 %v123, %v124
    %v126 = vrot.slane %v125, 2
    %v127 = vadd.f32 %v125, %v126
    %v128 = vrot.slane %v127, 1
    %v129 = vadd.f32 %v127, %v128
    %v130 = vsel %vm120, %v112, 0.0
    %v131 = vsel %vm120, %v115, 0.0
    %v132 = vadd.f32 %v130, %v131
    %v133 = vrot.slane %v132, 4
    %v134 = vadd.f32 %v132, %v133
    %v135 = vrot.slane %v134, 2
    %v136 = vadd.f32 %v134, %v135
    %v137 = vrot.slane %v136, 1
    %v138 = vadd.f32 %v136, %v137
    %v139 = vrcp.pop 16.0
    %v140 = vmul.f32 %v129, %v139
    %v141 = vmul.f32 %v138, %v139
    %v142 = vsub.f32 %v104, %v140
    %v143 = vsub.f32 %v107, %v140
    %v144 = vsub.f32 %v112, %v141
    %v145 = vsub.f32 %v115, %v141
    %v146 = vmul.f32 %v142, %v142
    %v147 = vmul.f32 %v143, %v143
    %v148 = vmul.f32 %v144, %v144
    %v149 = vmul.f32 %v145, %v145
    %v150 = vsel %vm120, %v146, 0.0
    %v151 = vsel %vm120, %v147, 0.0
    %v152 = vadd.f32 %v150, %v151
    %v153 = vrot.slane %v152, 4
    %v154 = vadd.f32 %v152, %v153
    %v155 = vrot.slane %v154, 2
    %v156 = vadd.f32 %v154, %v155
    %v157 = vrot.slane %v156, 1
    %v158 = vadd.f32 %v156, %v157
    %v159 = vsel %vm120, %v148, 0.0
    %v160 = vsel %vm120, %v149, 0.0
    %v161 = vadd.f32 %v159, %v160
    %v162 = vrot.slane %v161, 4
    %v163 = vadd.f32 %v161, %v162
    %v164 = vrot.slane %v163, 2
    %v165 = vadd.f32 %v163, %v164
    %v166 = vrot.slane %v165, 1
    %v167 = vadd.f32 %v165, %v166
    %v168 = vmul.f32 %v158, %v139
    %v169 = vmul.f32 %v167, %v139
    %v170 = vadd.f32 %v168, 1e-05
    %v171 = vadd.f32 %v169, 1e-05
    %v172 = vrsqrt.pop %v170
    %v173 = vrsqrt.pop %v171
    %v174 = vmul.f32 %v142, %v172
    %v175 = vmul.f32 %v143, %v172
    %v176 = vmul.f32 %v144, %v173
    %v177 = vmul.f32 %v145, %v173
    %v178 = vlaneseq
    %v179 = vshrl.u32 %v178, 7
    %v180 = vsub.s32 0, %v179
    %v181 = vrot.slane %v118, %v180
    %v182 = vmul.f32 %v174, %v181
    %v183 = vmul.f32 %v175, %v181
    %v184 = vmul.f32 %v176, %v181
    %v185 = vmul.f32 %v177, %v181
    %v186 = vlaneseq
    %v187 = vshrl.u32 %v186, 7
    %v188 = vsub.s32 0, %v187
    %v189 = vrot.slane %v119, %v188
    %v190 = vadd.f32 %v182, %v189
    %v191 = vadd.f32 %v183, %v189
    %v192 = vadd.f32 %v184, %v189
    %v193 = vadd.f32 %v185, %v189
    %vm194 = vcmp.ge.f32.partialorder %v190, 0.0
    %vm195 = vcmp.ge.f32.partialorder %v191, 0.0
    %vm196 = vcmp.ge.f32.partialorder %v192, 0.0
    %vm197 = vcmp.ge.f32.partialorder %v193, 0.0
    %v198 = vmul.f32 %v190, 0.01
    %v199 = vmul.f32 %v191, 0.01
    %v200 = vmul.f32 %v192, 0.01
    %v201 = vmul.f32 %v193, 0.01
    %v202 = vsel %vm194, %v190, %v198
    %v203 = vsel %vm195, %v191, %v199
    %v204 = vsel %vm196, %v192, %v200
    %v205 = vsel %vm197, %v193, %v201
    %v206 = vpack.c.bf16 %v203, %v202
    %v207 = vpack.c.bf16 %v205, %v204
    %v208 = vld [vmem:[%s2 + $0x8] sm:$0xf]
    %v209 = vld [vmem:[%s2 + $0xc] sm:$0xf]
    %v210 = vld [vmem:[%s2 + $0x10] sm:$0xf]
    %v211 = vld [vmem:[%s2 + $0x14] sm:$0xf]
    %v212 = vld [vmem:[%s5 + $0x3] sm:$0x1]
    %v213 = vlaneseq
    %v214 = vshrl.u32 %v213, 7
    %v215 = vsub.s32 0, %v214
    %v216 = vrot.slane %v212, %v215
    %v221 = vunpack.c.l.b16 %v208
    %v222 = vunpack.c.l.b16 %v209
    %v223 = vunpack.c.l.b16 %v210
    %v224 = vunpack.c.l.b16 %v211
    %v225 = vpack.c.b16 %v222, %v221
    %v226 = vpack.c.b16 %v224, %v223
    %v230 = vsel %vm120, %v206, 0
    %v233 = vsel %vm120, %v207, 0
    %235 = vmatprep.subr.bf16.mxu0 0
    %236 = vmatpush1.bf16.msra.mxu0 %v225
    %237 = vmatprep.subr.bf16.mxu0 0
    %238 = vmatpush1.bf16.msra.mxu0 %v226
    %239 = vmatprep.subr.bf16.mxu0 0
    %240 = vmatpush1.bf16.msra.mxu0 0
    %241 = vmatprep.subr.bf16.mxu0 0
    %242 = vmatpush1.bf16.msra.mxu0 0
    %243 = vmatprep.subr.bf16.mxu0 0
    %244 = vmatpush1.bf16.msra.mxu0 0
    %245 = vmatprep.subr.bf16.mxu0 0
    %246 = vmatpush1.bf16.msra.mxu0 0
    %247 = vmatprep.subr.bf16.mxu0 0
    %248 = vmatpush1.bf16.msra.mxu0 0
    %249 = vmatprep.subr.bf16.mxu0 0
    %250 = vmatpush1.bf16.msra.mxu0 0
    %251 = vmatprep.subr.bf16.mxu0 0
    %252 = vmatpush1.bf16.msra.mxu0 0
    %253 = vmatprep.subr.bf16.mxu0 0
    %254 = vmatpush1.bf16.msra.mxu0 0
    %255 = vmatprep.subr.bf16.mxu0 0
    %256 = vmatpush1.bf16.msra.mxu0 0
    %257 = vmatprep.subr.bf16.mxu0 0
    %258 = vmatpush1.bf16.msra.mxu0 0
    %259 = vmatprep.subr.bf16.mxu0 0
    %260 = vmatpush1.bf16.msra.mxu0 0
    %261 = vmatprep.subr.bf16.mxu0 0
    %262 = vmatpush1.bf16.msra.mxu0 0
    %263 = vmatprep.subr.bf16.mxu0 0
    %264 = vmatpush1.bf16.msra.mxu0 0
    %265 = vmatprep.subr.bf16.mxu0 0
    %266 = vmatpush1.bf16.msra.mxu0 0
    %267 = vmatprep.mubr.bf16.mxu0 0
    %268 = vmatmul.mubr.bf16.gmra.mrb[0].mxu0 %v230
    %v269 = vpop.f32.mrb[0].mxu0
    %v270 = vadd.f32 %v216, %v269
    %v271 = vpop.f32.mrb[0].mxu0
    %v272 = vpop.f32.mrb[0].mxu0
    %v273 = vadd.f32 %v216, %v272
    %v274 = vpop.f32.mrb[0].mxu0
    %275 = vmatprep.mubr.bf16.mxu0 0
    %276 = vmatmul.mubr.bf16.gmra.mrb[0].mxu0 %v233
    %v277 = vpop.f32.mrb[0].mxu0
    %v278 = vadd.f32 %v216, %v277
    %v279 = vpop.f32.mrb[0].mxu0
    %v280 = vpop.f32.mrb[0].mxu0
    %v281 = vadd.f32 %v216, %v280
    %v282 = vpop.f32.mrb[0].mxu0
    %283 = vdwg.mxu0
    %s284 = sld [smem:[#allocation2]]
    %v285 = vpack.c.bf16 %v273, %v270
    %v286 = vpack.c.bf16 %v281, %v278
    %v287 = vld [vmem:[%s2 + $0x18] sm:$0xf]
    %v288 = vld [vmem:[%s2 + $0x1c] sm:$0xf]
    %v289 = vld [vmem:[%s2 + $0x20] sm:$0xf]
    %v290 = vld [vmem:[%s2 + $0x24] sm:$0xf]
    %v291 = vld [vmem:[%s5 + $0x4] sm:$0x1]
    %v292 = vlaneseq
    %v293 = vshrl.u32 %v292, 7
    %v294 = vsub.s32 0, %v293
    %v295 = vrot.slane %v291, %v294
    %v300 = vunpack.c.l.b16 %v287
    %v301 = vunpack.c.l.b16 %v288
    %v302 = vunpack.c.l.b16 %v289
    %v303 = vunpack.c.l.b16 %v290
    %v304 = vpack.c.b16 %v301, %v300
    %v305 = vpack.c.b16 %v303, %v302
    %v309 = vsel %vm120, %v285, 0
    %v312 = vsel %vm120, %v286, 0
    %314 = vmatprep.subr.bf16.mxu0 0
    %315 = vmatpush1.bf16.msra.mxu0 %v304
    %316 = vmatprep.subr.bf16.mxu0 0
    %317 = vmatpush1.bf16.msra.mxu0 %v305
    %318 = vmatprep.subr.bf16.mxu0 0
    %319 = vmatpush1.bf16.msra.mxu0 0
    %320 = vmatprep.subr.bf16.mxu0 0
    %321 = vmatpush1.bf16.msra.mxu0 0
    %322 = vmatprep.subr.bf16.mxu0 0
    %323 = vmatpush1.bf16.msra.mxu0 0
    %324 = vmatprep.subr.bf16.mxu0 0
    %325 = vmatpush1.bf16.msra.mxu0 0
    %326 = vmatprep.subr.bf16.mxu0 0
    %327 = vmatpush1.bf16.msra.mxu0 0
    %328 = vmatprep.subr.bf16.mxu0 0
    %329 = vmatpush1.bf16.msra.mxu0 0
    %330 = vmatprep.subr.bf16.mxu0 0
    %331 = vmatpush1.bf16.msra.mxu0 0
    %332 = vmatprep.subr.bf16.mxu0 0
    %333 = vmatpush1.bf16.msra.mxu0 0
    %334 = vmatprep.subr.bf16.mxu0 0
    %335 = vmatpush1.bf16.msra.mxu0 0
    %336 = vmatprep.subr.bf16.mxu0 0
    %337 = vmatpush1.bf16.msra.mxu0 0
    %338 = vmatprep.subr.bf16.mxu0 0
    %339 = vmatpush1.bf16.msra.mxu0 0
    %340 = vmatprep.subr.bf16.mxu0 0
    %341 = vmatpush1.bf16.msra.mxu0 0
    %342 = vmatprep.subr.bf16.mxu0 0
    %343 = vmatpush1.bf16.msra.mxu0 0
    %344 = vmatprep.subr.bf16.mxu0 0
    %345 = vmatpush1.bf16.msra.mxu0 0
    %346 = vmatprep.mubr.bf16.mxu0 0
    %347 = vmatmul.mubr.bf16.gmra.mrb[0].mxu0 %v309
    %v348 = vpop.f32.mrb[0].mxu0
    %v349 = vadd.f32 %v295, %v348
    %v350 = vpop.f32.mrb[0].mxu0
    %v351 = vpop.f32.mrb[0].mxu0
    %v352 = vadd.f32 %v295, %v351
    %v353 = vpop.f32.mrb[0].mxu0
    %354 = vmatprep.mubr.bf16.mxu0 0
    %355 = vmatmul.mubr.bf16.gmra.mrb[0].mxu0 %v312
    %v356 = vpop.f32.mrb[0].mxu0
    %v357 = vadd.f32 %v295, %v356
    %v358 = vpop.f32.mrb[0].mxu0
    %v359 = vpop.f32.mrb[0].mxu0
    %v360 = vadd.f32 %v295, %v359
    %v361 = vpop.f32.mrb[0].mxu0
    %362 = vdwg.mxu0
    %v363 = vld [vmem:[%s1] sm:$0xff]
    %v364 = vsel %vm120, %v349, 0.0
    %v365 = vsel %vm120, %v352, 0.0
    %v366 = vadd.f32 %v364, %v365
    %v367 = vrot.slane %v366, 4
    %v368 = vadd.f32 %v366, %v367
    %v369 = vrot.slane %v368, 2
    %v370 = vadd.f32 %v368, %v369
    %v371 = vrot.slane %v370, 1
    %v372 = vadd.f32 %v370, %v371
    %v373 = vsel %vm120, %v357, 0.0
    %v374 = vsel %vm120, %v360, 0.0
    %v375 = vadd.f32 %v373, %v374
    %v376 = vrot.slane %v375, 4
    %v377 = vadd.f32 %v375, %v376
    %v378 = vrot.slane %v377, 2
    %v379 = vadd.f32 %v377, %v378
    %v380 = vrot.slane %v379, 1
    %v381 = vadd.f32 %v379, %v380
    %v382 = vsel %vm120, %v363, 0.0
    %v383 = vrot.slane %v382, 4
    %v384 = vadd.f32 %v382, %v383
    %v385 = vrot.slane %v384, 2
    %v386 = vadd.f32 %v384, %v385
    %v387 = vrot.slane %v386, 1
    %v388 = vadd.f32 %v386, %v387
    %v389 = vadd.f32 %v372, %v388
    %v390 = vadd.f32 %v381, %v388
    %v391 = vmul.f32 %v389, 0.041666668
    %v392 = vmul.f32 %v390, 0.041666668
    %v393 = vlaneseq
    %v394 = vshrl.u32 %v393, 7
    %v395 = vsub.s32 0, %v394
    %v396 = vrot.slane %v391, %v395
    %v397 = vlaneseq
    %v398 = vshrl.u32 %v397, 7
    %v399 = vsub.s32 0, %v398
    %v400 = vrot.slane %v392, %v399
    %v401 = vsub.f32 %v349, %v396
    %v402 = vsub.f32 %v352, %v396
    %v403 = vsub.f32 %v357, %v400
    %v404 = vsub.f32 %v360, %v400
    %v405 = vsub.f32 %v363, %v396
    %v406 = vsub.f32 %v363, %v400
    %v407 = vmul.f32 %v401, %v401
    %v408 = vmul.f32 %v402, %v402
    %v409 = vmul.f32 %v403, %v403
    %v410 = vmul.f32 %v404, %v404
    %v411 = vsel %vm120, %v407, 0.0
    %v412 = vsel %vm120, %v408, 0.0
    %v413 = vadd.f32 %v411, %v412
    %v414 = vrot.slane %v413, 4
    %v415 = vadd.f32 %v413, %v414
    %v416 = vrot.slane %v415, 2
    %v417 = vadd.f32 %v415, %v416
    %v418 = vrot.slane %v417, 1
    %v419 = vadd.f32 %v417, %v418
    %v420 = vsel %vm120, %v409, 0.0
    %v421 = vsel %vm120, %v410, 0.0
    %v422 = vadd.f32 %v420, %v421
    %v423 = vrot.slane %v422, 4
    %v424 = vadd.f32 %v422, %v423
    %v425 = vrot.slane %v424, 2
    %v426 = vadd.f32 %v424, %v425
    %v427 = vrot.slane %v426, 1
    %v428 = vadd.f32 %v426, %v427
    %v429 = vmul.f32 %v405, %v405
    %v430 = vmul.f32 %v406, %v406
    %v431 = vsel %vm120, %v429, 0.0
    %v432 = vrot.slane %v431, 4
    %v433 = vadd.f32 %v431, %v432
    %v434 = vrot.slane %v433, 2
    %v435 = vadd.f32 %v433, %v434
    %v436 = vrot.slane %v435, 1
    %v437 = vadd.f32 %v435, %v436
    %v438 = vsel %vm120, %v430, 0.0
    %v439 = vrot.slane %v438, 4
    %v440 = vadd.f32 %v438, %v439
    %v441 = vrot.slane %v440, 2
    %v442 = vadd.f32 %v440, %v441
    %v443 = vrot.slane %v442, 1
    %v444 = vadd.f32 %v442, %v443
    %v445 = vadd.f32 %v419, %v437
    %v446 = vadd.f32 %v428, %v444
    %v447 = vmul.f32 %v445, 0.041666668
    %v448 = vmul.f32 %v446, 0.041666668
    %v449 = vadd.f32 %v447, 1e-05
    %v450 = vadd.f32 %v448, 1e-05
    %v451 = vrsqrt.pop %v449
    %v452 = vrsqrt.pop %v450
    %v453 = vld [vmem:[%s5 + $0x5] sm:$0x1]
    %v454 = vld [vmem:[%s5 + $0x6] sm:$0x1]
    %v455 = vmul.f32 %v401, %v451
    %v456 = vmul.f32 %v402, %v451
    %v457 = vmul.f32 %v405, %v451
    %v458 = vmul.f32 %v403, %v452
    %v459 = vmul.f32 %v404, %v452
    %v460 = vmul.f32 %v406, %v452
    %v461 = vlaneseq
    %v462 = vshrl.u32 %v461, 7
    %v463 = vsub.s32 0, %v462
    %v464 = vrot.slane %v453, %v463
    %v465 = vmul.f32 %v455, %v464
    %v466 = vmul.f32 %v456, %v464
    %v467 = vmul.f32 %v457, %v464
    %v468 = vmul.f32 %v458, %v464
    %v469 = vmul.f32 %v459, %v464
    %v470 = vmul.f32 %v460, %v464
    %v471 = vlaneseq
    %v472 = vshrl.u32 %v471, 7
    %v473 = vsub.s32 0, %v472
    %v474 = vrot.slane %v454, %v473
    %v475 = vadd.f32 %v465, %v474
    %v476 = vadd.f32 %v466, %v474
    %v477 = vadd.f32 %v467, %v474
    %v478 = vadd.f32 %v468, %v474
    %v479 = vadd.f32 %v469, %v474
    %v480 = vadd.f32 %v470, %v474
    %vm481 = vcmp.ge.f32.partialorder %v475, 0.0
    %vm482 = vcmp.ge.f32.partialorder %v476, 0.0
    %vm483 = vcmp.ge.f32.partialorder %v477, 0.0
    %vm484 = vcmp.ge.f32.partialorder %v478, 0.0
    %vm485 = vcmp.ge.f32.partialorder %v479, 0.0
    %vm486 = vcmp.ge.f32.partialorder %v480, 0.0
    %v487 = vstv %s284
    %v488 = vmul.f32 %v475, %v487
    %v489 = vmul.f32 %v476, %v487
    %v490 = vmul.f32 %v477, %v487
    %v491 = vmul.f32 %v478, %v487
    %v492 = vmul.f32 %v479, %v487
    %v493 = vmul.f32 %v480, %v487
    %v494 = vsel %vm481, %v475, %v488
    %v495 = vsel %vm482, %v476, %v489
    %v496 = vsel %vm483, %v477, %v490
    %v497 = vsel %vm484, %v478, %v491
    %v498 = vsel %vm485, %v479, %v492
    %v499 = vsel %vm486, %v480, %v493
    %v500 = vpack.c.bf16 %v495, %v494
    %v501 = vpack.c.bf16 %v497, %v496
    %v502 = vpack.c.bf16 %v499, %v498
    %v503 = vld [vmem:[%s2 + $0x28] sm:$0xf]
    %v504 = vld [vmem:[%s2 + $0x2c] sm:$0xf]
    %v505 = vld [vmem:[%s2 + $0x30] sm:$0xf]
    %v506 = vld [vmem:[%s2 + $0x34] sm:$0xf]
    %v507 = vld [vmem:[%s5 + $0x7] sm:$0x1]
    %v508 = vlaneseq
    %v509 = vshrl.u32 %v508, 7
    %v510 = vsub.s32 0, %v509
    %v511 = vrot.slane %v507, %v510
    %v516 = vunpack.c.l.b16 %v503
    %v517 = vunpack.c.l.b16 %v504
    %v518 = vunpack.c.l.b16 %v505
    %v519 = vunpack.c.l.b16 %v506
    %v520 = vpack.c.b16 %v517, %v516
    %v521 = vpack.c.b16 %v519, %v518
    %v525 = vsel %vm120, %v500, 0
    %v528 = vsel %vm120, %v501, 0
    %v531 = vsel %vm120, %v502, 0
    %533 = vmatprep.subr.bf16.mxu0 0
    %534 = vmatpush1.bf16.msra.mxu0 %v520
    %535 = vmatprep.subr.bf16.mxu0 0
    %536 = vmatpush1.bf16.msra.mxu0 %v521
    %537 = vmatprep.subr.bf16.mxu0 0
    %538 = vmatpush1.bf16.msra.mxu0 0
    %539 = vmatprep.subr.bf16.mxu0 0
    %540 = vmatpush1.bf16.msra.mxu0 0
    %541 = vmatprep.subr.bf16.mxu0 0
    %542 = vmatpush1.bf16.msra.mxu0 0
    %543 = vmatprep.subr.bf16.mxu0 0
    %544 = vmatpush1.bf16.msra.mxu0 0
    %545 = vmatprep.subr.bf16.mxu0 0
    %546 = vmatpush1.bf16.msra.mxu0 0
    %547 = vmatprep.subr.bf16.mxu0 0
    %548 = vmatpush1.bf16.msra.mxu0 0
    %549 = vmatprep.subr.bf16.mxu0 0
    %550 = vmatpush1.bf16.msra.mxu0 0
    %551 = vmatprep.subr.bf16.mxu0 0
    %552 = vmatpush1.bf16.msra.mxu0 0
    %553 = vmatprep.subr.bf16.mxu0 0
    %554 = vmatpush1.bf16.msra.mxu0 0
    %555 = vmatprep.subr.bf16.mxu0 0
    %556 = vmatpush1.bf16.msra.mxu0 0
    %557 = vmatprep.subr.bf16.mxu0 0
    %558 = vmatpush1.bf16.msra.mxu0 0
    %559 = vmatprep.subr.bf16.mxu0 0
    %560 = vmatpush1.bf16.msra.mxu0 0
    %561 = vmatprep.subr.bf16.mxu0 0
    %562 = vmatpush1.bf16.msra.mxu0 0
    %563 = vmatprep.subr.bf16.mxu0 0
    %564 = vmatpush1.bf16.msra.mxu0 0
    %565 = vmatprep.mubr.bf16.mxu0 0
    %566 = vmatmul.mubr.bf16.gmra.mrb[0].mxu0 %v525
    %v567 = vpop.f32.mrb[0].mxu0
    %v568 = vadd.f32 %v511, %v567
    %v569 = vpop.f32.mrb[0].mxu0
    %v570 = vpop.f32.mrb[0].mxu0
    %v571 = vadd.f32 %v511, %v570
    %v572 = vpop.f32.mrb[0].mxu0
    %573 = vmatprep.mubr.bf16.mxu0 0
    %574 = vmatmul.mubr.bf16.gmra.mrb[0].mxu0 %v528
    %v575 = vpop.f32.mrb[0].mxu0
    %v576 = vadd.f32 %v511, %v575
    %v577 = vpop.f32.mrb[0].mxu0
    %v578 = vpop.f32.mrb[0].mxu0
    %v579 = vadd.f32 %v511, %v578
    %v580 = vpop.f32.mrb[0].mxu0
    %581 = vmatprep.mubr.bf16.mxu0 0
    %582 = vmatmul.mubr.bf16.gmra.mrb[0].mxu0 %v531
    %v583 = vpop.f32.mrb[0].mxu0
    %v584 = vadd.f32 %v511, %v583
    %v585 = vpop.f32.mrb[0].mxu0
    %v586 = vpop.f32.mrb[0].mxu0
    %v587 = vadd.f32 %v511, %v586
    %v588 = vpop.f32.mrb[0].mxu0
    %589 = vdwg.mxu0
    %v590 = vpack.c.bf16 %v571, %v568
    %v591 = vpack.c.bf16 %v584, %v579
    %v592 = vld [vmem:[%s2 + $0x38] sm:$0xf]
    %v593 = vld [vmem:[%s2 + $0x3c] sm:$0xf]
    %v594 = vld [vmem:[%s2 + $0x40] sm:$0xf]
    %v595 = vld [vmem:[%s2 + $0x44] sm:$0xf]
    %v600 = vunpack.c.l.b16 %v592
    %v601 = vunpack.c.l.b16 %v593
    %v602 = vunpack.c.l.b16 %v594
    %v603 = vunpack.c.l.b16 %v595
    %v604 = vpack.c.b16 %v601, %v600
    %v605 = vpack.c.b16 %v603, %v602
    %v609 = vsel %vm120, %v590, 0
    %v612 = vsel %vm120, %v591, 0
    %614 = vmatprep.subr.bf16.mxu0 0
    %615 = vmatpush1.bf16.msra.mxu0 %v604
    %616 = vmatprep.subr.bf16.mxu0 0
    %617 = vmatpush1.bf16.msra.mxu0 %v605
    %618 = vmatprep.subr.bf16.mxu0 0
    %619 = vmatpush1.bf16.msra.mxu0 0
    %620 = vmatprep.subr.bf16.mxu0 0
    %621 = vmatpush1.bf16.msra.mxu0 0
    %622 = vmatprep.subr.bf16.mxu0 0
    %623 = vmatpush1.bf16.msra.mxu0 0
    %624 = vmatprep.subr.bf16.mxu0 0
    %625 = vmatpush1.bf16.msra.mxu0 0
    %626 = vmatprep.subr.bf16.mxu0 0
    %627 = vmatpush1.bf16.msra.mxu0 0
    %628 = vmatprep.subr.bf16.mxu0 0
    %629 = vmatpush1.bf16.msra.mxu0 0
    %630 = vmatprep.subr.bf16.mxu0 0
    %631 = vmatpush1.bf16.msra.mxu0 0
    %632 = vmatprep.subr.bf16.mxu0 0
    %633 = vmatpush1.bf16.msra.mxu0 0
    %634 = vmatprep.subr.bf16.mxu0 0
    %635 = vmatpush1.bf16.msra.mxu0 0
    %636 = vmatprep.subr.bf16.mxu0 0
    %637 = vmatpush1.bf16.msra.mxu0 0
    %638 = vmatprep.subr.bf16.mxu0 0
    %639 = vmatpush1.bf16.msra.mxu0 0
    %640 = vmatprep.subr.bf16.mxu0 0
    %641 = vmatpush1.bf16.msra.mxu0 0
    %642 = vmatprep.subr.bf16.mxu0 0
    %643 = vmatpush1.bf16.msra.mxu0 0
    %644 = vmatprep.subr.bf16.mxu0 0
    %645 = vmatpush1.bf16.msra.mxu0 0
    %646 = vmatprep.mubr.bf16.mxu0 0
    %647 = vmatmul.mubr.bf16.gmra.mrb[0].mxu0 %v609
    %v648 = vpop.f32.mrb[0].mxu0
    %v649 = vadd.f32 0.0, %v648
    %v650 = vpop.f32.mrb[0].mxu0
    %v651 = vpop.f32.mrb[0].mxu0
    %v652 = vadd.f32 0.0, %v651
    %v653 = vpop.f32.mrb[0].mxu0
    %654 = vmatprep.mubr.bf16.mxu0 0
    %655 = vmatmul.mubr.bf16.gmra.mrb[0].mxu0 %v612
    %v656 = vpop.f32.mrb[0].mxu0
    %v657 = vadd.f32 0.0, %v656
    %v658 = vpop.f32.mrb[0].mxu0
    %v659 = vpop.f32.mrb[0].mxu0
    %v660 = vadd.f32 0.0, %v659
    %v661 = vpop.f32.mrb[0].mxu0
    %662 = vdwg.mxu0
    %v663 = vpack.c.bf16 %v587, %v576
    %v664 = vld [vmem:[%s3] sm:$0xf]
    %v665 = vld [vmem:[%s3 + $0x4] sm:$0xf]
    %v666 = vld [vmem:[%s3 + $0x8] sm:$0xf]
    %v667 = vld [vmem:[%s3 + $0xc] sm:$0xf]
    %v672 = vunpack.c.l.b16 %v664
    %v673 = vunpack.c.l.b16 %v665
    %v674 = vunpack.c.l.b16 %v666
    %v675 = vunpack.c.l.b16 %v667
    %v676 = vpack.c.b16 %v673, %v672
    %v677 = vpack.c.b16 %v675, %v674
    %v681 = vsel %vm120, %v663, 0
    %683 = vmatprep.subr.bf16.mxu0 0
    %684 = vmatpush1.bf16.msra.mxu0 %v676
    %685 = vmatprep.subr.bf16.mxu0 0
    %686 = vmatpush1.bf16.msra.mxu0 %v677
    %687 = vmatprep.subr.bf16.mxu0 0
    %688 = vmatpush1.bf16.msra.mxu0 0
    %689 = vmatprep.subr.bf16.mxu0 0
    %690 = vmatpush1.bf16.msra.mxu0 0
    %691 = vmatprep.subr.bf16.mxu0 0
    %692 = vmatpush1.bf16.msra.mxu0 0
    %693 = vmatprep.subr.bf16.mxu0 0
    %694 = vmatpush1.bf16.msra.mxu0 0
    %695 = vmatprep.subr.bf16.mxu0 0
    %696 = vmatpush1.bf16.msra.mxu0 0
    %697 = vmatprep.subr.bf16.mxu0 0
    %698 = vmatpush1.bf16.msra.mxu0 0
    %699 = vmatprep.subr.bf16.mxu0 0
    %700 = vmatpush1.bf16.msra.mxu0 0
    %701 = vmatprep.subr.bf16.mxu0 0
    %702 = vmatpush1.bf16.msra.mxu0 0
    %703 = vmatprep.subr.bf16.mxu0 0
    %704 = vmatpush1.bf16.msra.mxu0 0
    %705 = vmatprep.subr.bf16.mxu0 0
    %706 = vmatpush1.bf16.msra.mxu0 0
    %707 = vmatprep.subr.bf16.mxu0 0
    %708 = vmatpush1.bf16.msra.mxu0 0
    %709 = vmatprep.subr.bf16.mxu0 0
    %710 = vmatpush1.bf16.msra.mxu0 0
    %711 = vmatprep.subr.bf16.mxu0 0
    %712 = vmatpush1.bf16.msra.mxu0 0
    %713 = vmatprep.subr.bf16.mxu0 0
    %714 = vmatpush1.bf16.msra.mxu0 0
    %715 = vmatprep.mubr.bf16.mxu0 0
    %716 = vmatmul.mubr.bf16.gmra.mrb[0].mxu0 %v681
    %v717 = vpop.f32.mrb[0].mxu0
    %v718 = vadd.f32 0.0, %v717
    %v719 = vpop.f32.mrb[0].mxu0
    %v720 = vpop.f32.mrb[0].mxu0
    %v721 = vadd.f32 0.0, %v720
    %v722 = vpop.f32.mrb[0].mxu0
    %723 = vdwg.mxu0
    %v724 = vpack.c.bf16 %v652, %v649
    %v725 = vpack.c.bf16 %v660, %v657
    %v726 = vpack.c.bf16 %v718, %v718
    %v727 = vpack.c.bf16 %v721, %v721
    %v729 = vsel %vm120, %v724, 0
    %v732 = vsel %vm120, %v726, 0
    %734 = vmatprep.subr.bf16.mxu0 0
    %735 = vmatpush1.bf16.xpose.msra.mxu0 %v732
    %736 = vmatprep.subr.bf16.mxu0 0
    %737 = vmatpush1.bf16.xpose.msra.mxu0 0
    %738 = vmatprep.subr.bf16.mxu0 0
    %739 = vmatpush1.bf16.xpose.msra.mxu0 0
    %740 = vmatprep.subr.bf16.mxu0 0
    %741 = vmatpush1.bf16.xpose.msra.mxu0 0
    %742 = vmatprep.subr.bf16.mxu0 0
    %743 = vmatpush1.bf16.xpose.msra.mxu0 0
    %744 = vmatprep.subr.bf16.mxu0 0
    %745 = vmatpush1.bf16.xpose.msra.mxu0 0
    %746 = vmatprep.subr.bf16.mxu0 0
    %747 = vmatpush1.bf16.xpose.msra.mxu0 0
    %748 = vmatprep.subr.bf16.mxu0 0
    %749 = vmatpush1.bf16.xpose.msra.mxu0 0
    %750 = vmatprep.subr.bf16.mxu0 0
    %751 = vmatpush1.bf16.xpose.msra.mxu0 0
    %752 = vmatprep.subr.bf16.mxu0 0
    %753 = vmatpush1.bf16.xpose.msra.mxu0 0
    %754 = vmatprep.subr.bf16.mxu0 0
    %755 = vmatpush1.bf16.xpose.msra.mxu0 0
    %756 = vmatprep.subr.bf16.mxu0 0
    %757 = vmatpush1.bf16.xpose.msra.mxu0 0
    %758 = vmatprep.subr.bf16.mxu0 0
    %759 = vmatpush1.bf16.xpose.msra.mxu0 0
    %760 = vmatprep.subr.bf16.mxu0 0
    %761 = vmatpush1.bf16.xpose.msra.mxu0 0
    %762 = vmatprep.subr.bf16.mxu0 0
    %763 = vmatpush1.bf16.xpose.msra.mxu0 0
    %764 = vmatprep.subr.bf16.mxu0 0
    %765 = vmatpush1.bf16.xpose.msra.mxu0 0
    %766 = vmatprep.mubr.bf16.mxu0 0
    %767 = vmatmul.mubr.bf16.gmra.mrb[0].mxu0 %v729
    %v768 = vpop.f32.mrb[0].mxu0
    %v769 = vadd.f32 0.0, %v768
    %v770 = vpop.f32.mrb[0].mxu0
    %v771 = vpop.f32.mrb[0].mxu0
    %v772 = vadd.f32 0.0, %v771
    %v773 = vpop.f32.mrb[0].mxu0
    %774 = vdwg.mxu0
    %v776 = vsel %vm120, %v725, 0
    %v779 = vsel %vm120, %v727, 0
    %781 = vmatprep.subr.bf16.mxu0 0
    %782 = vmatpush1.bf16.xpose.msra.mxu0 %v779
    %783 = vmatprep.subr.bf16.mxu0 0
    %784 = vmatpush1.bf16.xpose.msra.mxu0 0
    %785 = vmatprep.subr.bf16.mxu0 0
    %786 = vmatpush1.bf16.xpose.msra.mxu0 0
    %787 = vmatprep.subr.bf16.mxu0 0
    %788 = vmatpush1.bf16.xpose.msra.mxu0 0
    %789 = vmatprep.subr.bf16.mxu0 0
    %790 = vmatpush1.bf16.xpose.msra.mxu0 0
    %791 = vmatprep.subr.bf16.mxu0 0
    %792 = vmatpush1.bf16.xpose.msra.mxu0 0
    %793 = vmatprep.subr.bf16.mxu0 0
    %794 = vmatpush1.bf16.xpose.msra.mxu0 0
    %795 = vmatprep.subr.bf16.mxu0 0
    %796 = vmatpush1.bf16.xpose.msra.mxu0 0
    %797 = vmatprep.subr.bf16.mxu0 0
    %798 = vmatpush1.bf16.xpose.msra.mxu0 0
    %799 = vmatprep.subr.bf16.mxu0 0
    %800 = vmatpush1.bf16.xpose.msra.mxu0 0
    %801 = vmatprep.subr.bf16.mxu0 0
    %802 = vmatpush1.bf16.xpose.msra.mxu0 0
    %803 = vmatprep.subr.bf16.mxu0 0
    %804 = vmatpush1.bf16.xpose.msra.mxu0 0
    %805 = vmatprep.subr.bf16.mxu0 0
    %806 = vmatpush1.bf16.xpose.msra.mxu0 0
    %807 = vmatprep.subr.bf16.mxu0 0
    %808 = vmatpush1.bf16.xpose.msra.mxu0 0
    %809 = vmatprep.subr.bf16.mxu0 0
    %810 = vmatpush1.bf16.xpose.msra.mxu0 0
    %811 = vmatprep.subr.bf16.mxu0 0
    %812 = vmatpush1.bf16.xpose.msra.mxu0 0
    %813 = vmatprep.mubr.bf16.mxu0 0
    %814 = vmatmul.mubr.bf16.gmra.mrb[0].mxu0 %v776
    %v815 = vpop.f32.mrb[0].mxu0
    %v816 = vadd.f32 0.0, %v815
    %v817 = vpop.f32.mrb[0].mxu0
    %v818 = vpop.f32.mrb[0].mxu0
    %v819 = vadd.f32 0.0, %v818
    %v820 = vpop.f32.mrb[0].mxu0
    %821 = vdwg.mxu0
    %vm822 = vcmask 64512
    %v823 = vsel %vm822, %v769, -inf
    %824 = vmax.xlane.f32.xlu0 %v823
    %v825 = vpop.xlane.xlu0 %824
    %v826 = vsel %vm822, %v772, -inf
    %827 = vmax.xlane.f32.xlu0 %v826
    %v828 = vpop.xlane.xlu0 %827
    %v829 = vsel %vm822, %v816, -inf
    %830 = vmax.xlane.f32.xlu0 %v829
    %v831 = vpop.xlane.xlu0 %830
    %v832 = vsel %vm822, %v819, -inf
    %833 = vmax.xlane.f32.xlu0 %v832
    %v834 = vpop.xlane.xlu0 %833
    %v835 = vsub.f32 %v769, %v825
    %v836 = vsub.f32 %v772, %v828
    %v837 = vsub.f32 %v816, %v831
    %v838 = vsub.f32 %v819, %v834
    %v839 = vmul.f32 %v835, 1.442695
    %v840 = vpow.pop %v839
    %v841 = vmul.f32 %v836, 1.442695
    %v842 = vpow.pop %v841
    %v843 = vmul.f32 %v837, 1.442695
    %v844 = vpow.pop %v843
    %v845 = vmul.f32 %v838, 1.442695
    %v846 = vpow.pop %v845
    %v847 = vsel %vm822, %v840, 0.0
    %848 = vadd.xlane.f32.xlu0 %v847
    %v849 = vpop.xlane.xlu0 %848
    %v850 = vsel %vm822, %v842, 0.0
    %851 = vadd.xlane.f32.xlu0 %v850
    %v852 = vpop.xlane.xlu0 %851
    %v853 = vsel %vm822, %v844, 0.0
    %854 = vadd.xlane.f32.xlu0 %v853
    %v855 = vpop.xlane.xlu0 %854
    %v856 = vsel %vm822, %v846, 0.0
    %857 = vadd.xlane.f32.xlu0 %v856
    %v858 = vpop.xlane.xlu0 %857
    %v859 = vrcp.pop %v849
    %v860 = vrcp.pop %v852
    %v861 = vrcp.pop %v855
    %v862 = vrcp.pop %v858
    %v863 = vmul.f32 %v840, %v859
    %v864 = vmul.f32 %v842, %v860
    %v865 = vmul.f32 %v844, %v861
    %v866 = vmul.f32 %v846, %v862
    %v867 = vpack.c.bf16 %v864, %v863
    %v868 = vpack.c.bf16 %v866, %v865
    %870 = vrot.lane.b32.xlu0 %v726, 96
    %v871 = vpop.permute.xlu0 %870
    %v873 = vsel %vm822, %v867, 0
    %vm875 = vcmask 1043456
    %v877 = vsel %vm875, %v871, 0
    %879 = vmatprep.subr.bf16.mxu0 0
    %880 = vmatpush1.bf16.msra.mxu0 %v877
    %881 = vmatprep.subr.bf16.mxu0 0
    %882 = vmatpush1.bf16.msra.mxu0 0
    %883 = vmatprep.subr.bf16.mxu0 0
    %884 = vmatpush1.bf16.msra.mxu0 0
    %885 = vmatprep.subr.bf16.mxu0 0
    %886 = vmatpush1.bf16.msra.mxu0 0
    %887 = vmatprep.subr.bf16.mxu0 0
    %888 = vmatpush1.bf16.msra.mxu0 0
    %889 = vmatprep.subr.bf16.mxu0 0
    %890 = vmatpush1.bf16.msra.mxu0 0
    %891 = vmatprep.subr.bf16.mxu0 0
    %892 = vmatpush1.bf16.msra.mxu0 0
    %893 = vmatprep.subr.bf16.mxu0 0
    %894 = vmatpush1.bf16.msra.mxu0 0
    %895 = vmatprep.subr.bf16.mxu0 0
    %896 = vmatpush1.bf16.msra.mxu0 0
    %897 = vmatprep.subr.bf16.mxu0 0
    %898 = vmatpush1.bf16.msra.mxu0 0
    %899 = vmatprep.subr.bf16.mxu0 0
    %900 = vmatpush1.bf16.msra.mxu0 0
    %901 = vmatprep.subr.bf16.mxu0 0
    %902 = vmatpush1.bf16.msra.mxu0 0
    %903 = vmatprep.subr.bf16.mxu0 0
    %904 = vmatpush1.bf16.msra.mxu0 0
    %905 = vmatprep.subr.bf16.mxu0 0
    %906 = vmatpush1.bf16.msra.mxu0 0
    %907 = vmatprep.subr.bf16.mxu0 0
    %908 = vmatpush1.bf16.msra.mxu0 0
    %909 = vmatprep.subr.bf16.mxu0 0
    %910 = vmatpush1.bf16.msra.mxu0 0
    %911 = vmatprep.mubr.bf16.mxu0 0
    %912 = vmatmul.mubr.bf16.gmra.mrb[0].mxu0 %v873
    %v913 = vpop.f32.mrb[0].mxu0
    %v914 = vadd.f32 0.0, %v913
    %v915 = vpop.f32.mrb[0].mxu0
    %v916 = vpop.f32.mrb[0].mxu0
    %v917 = vadd.f32 0.0, %v916
    %v918 = vpop.f32.mrb[0].mxu0
    %919 = vdwg.mxu0
    %921 = vrot.lane.b32.xlu0 %v727, 96
    %v922 = vpop.permute.xlu0 %921
    %v924 = vsel %vm822, %v868, 0
    %v927 = vsel %vm875, %v922, 0
    %929 = vmatprep.subr.bf16.mxu0 0
    %930 = vmatpush1.bf16.msra.mxu0 %v927
    %931 = vmatprep.subr.bf16.mxu0 0
    %932 = vmatpush1.bf16.msra.mxu0 0
    %933 = vmatprep.subr.bf16.mxu0 0
    %934 = vmatpush1.bf16.msra.mxu0 0
    %935 = vmatprep.subr.bf16.mxu0 0
    %936 = vmatpush1.bf16.msra.mxu0 0
    %937 = vmatprep.subr.bf16.mxu0 0
    %938 = vmatpush1.bf16.msra.mxu0 0
    %939 = vmatprep.subr.bf16.mxu0 0
    %940 = vmatpush1.bf16.msra.mxu0 0
    %941 = vmatprep.subr.bf16.mxu0 0
    %942 = vmatpush1.bf16.msra.mxu0 0
    %943 = vmatprep.subr.bf16.mxu0 0
    %944 = vmatpush1.bf16.msra.mxu0 0
    %945 = vmatprep.subr.bf16.mxu0 0
    %946 = vmatpush1.bf16.msra.mxu0 0
    %947 = vmatprep.subr.bf16.mxu0 0
    %948 = vmatpush1.bf16.msra.mxu0 0
    %949 = vmatprep.subr.bf16.mxu0 0
    %950 = vmatpush1.bf16.msra.mxu0 0
    %951 = vmatprep.subr.bf16.mxu0 0
    %952 = vmatpush1.bf16.msra.mxu0 0
    %953 = vmatprep.subr.bf16.mxu0 0
    %954 = vmatpush1.bf16.msra.mxu0 0
    %955 = vmatprep.subr.bf16.mxu0 0
    %956 = vmatpush1.bf16.msra.mxu0 0
    %957 = vmatprep.subr.bf16.mxu0 0
    %958 = vmatpush1.bf16.msra.mxu0 0
    %959 = vmatprep.subr.bf16.mxu0 0
    %960 = vmatpush1.bf16.msra.mxu0 0
    %961 = vmatprep.mubr.bf16.mxu0 0
    %962 = vmatmul.mubr.bf16.gmra.mrb[0].mxu0 %v924
    %v963 = vpop.f32.mrb[0].mxu0
    %v964 = vadd.f32 0.0, %v963
    %v965 = vpop.f32.mrb[0].mxu0
    %v966 = vpop.f32.mrb[0].mxu0
    %v967 = vadd.f32 0.0, %v966
    %v968 = vpop.f32.mrb[0].mxu0
    %969 = vdwg.mxu0
    %v970 = vadd.f32 %v568, %v914
    %v971 = vadd.f32 %v571, %v917
    %v972 = vadd.f32 %v579, %v964
    %v973 = vadd.f32 %v584, %v967
    %s974 = sld [smem:[#allocation2 + $0x1]]
    %v975 = vpack.c.bf16 %v971, %v970
    %v976 = vpack.c.bf16 %v973, %v972
    %v977 = vld [vmem:[%s3 + $0x10] sm:$0xf]
    %v978 = vld [vmem:[%s3 + $0x14] sm:$0xf]
    %v979 = vld [vmem:[%s3 + $0x18] sm:$0xf]
    %v980 = vld [vmem:[%s3 + $0x1c] sm:$0xf]
    %v981 = vld [vmem:[%s6] sm:$0x1]
    %v982 = vlaneseq
    %v983 = vshrl.u32 %v982, 7
    %v984 = vsub.s32 0, %v983
    %v985 = vrot.slane %v981, %v984
    %v990 = vunpack.c.l.b16 %v977
    %v991 = vunpack.c.l.b16 %v978
    %v992 = vunpack.c.l.b16 %v979
    %v993 = vunpack.c.l.b16 %v980
    %v994 = vpack.c.b16 %v991, %v990
    %v995 = vpack.c.b16 %v993, %v992
    %v999 = vsel %vm120, %v975, 0
    %v1002 = vsel %vm120, %v976, 0
    %1004 = vmatprep.subr.bf16.mxu0 0
    %1005 = vmatpush1.bf16.msra.mxu0 %v994
    %1006 = vmatprep.subr.bf16.mxu0 0
    %1007 = vmatpush1.bf16.msra.mxu0 %v995
    %1008 = vmatprep.subr.bf16.mxu0 0
    %1009 = vmatpush1.bf16.msra.mxu0 0
    %1010 = vmatprep.subr.bf16.mxu0 0
    %1011 = vmatpush1.bf16.msra.mxu0 0
    %1012 = vmatprep.subr.bf16.mxu0 0
    %1013 = vmatpush1.bf16.msra.mxu0 0
    %1014 = vmatprep.subr.bf16.mxu0 0
    %1015 = vmatpush1.bf16.msra.mxu0 0
    %1016 = vmatprep.subr.bf16.mxu0 0
    %1017 = vmatpush1.bf16.msra.mxu0 0
    %1018 = vmatprep.subr.bf16.mxu0 0
    %1019 = vmatpush1.bf16.msra.mxu0 0
    %1020 = vmatprep.subr.bf16.mxu0 0
    %1021 = vmatpush1.bf16.msra.mxu0 0
    %1022 = vmatprep.subr.bf16.mxu0 0
    %1023 = vmatpush1.bf16.msra.mxu0 0
    %1024 = vmatprep.subr.bf16.mxu0 0
    %1025 = vmatpush1.bf16.msra.mxu0 0
    %1026 = vmatprep.subr.bf16.mxu0 0
    %1027 = vmatpush1.bf16.msra.mxu0 0
    %1028 = vmatprep.subr.bf16.mxu0 0
    %1029 = vmatpush1.bf16.msra.mxu0 0
    %1030 = vmatprep.subr.bf16.mxu0 0
    %1031 = vmatpush1.bf16.msra.mxu0 0
    %1032 = vmatprep.subr.bf16.mxu0 0
    %1033 = vmatpush1.bf16.msra.mxu0 0
    %1034 = vmatprep.subr.bf16.mxu0 0
    %1035 = vmatpush1.bf16.msra.mxu0 0
    %1036 = vmatprep.mubr.bf16.mxu0 0
    %1037 = vmatmul.mubr.bf16.gmra.mrb[0].mxu0 %v999
    %v1038 = vpop.f32.mrb[0].mxu0
    %v1039 = vadd.f32 %v985, %v1038
    %v1040 = vpop.f32.mrb[0].mxu0
    %v1041 = vpop.f32.mrb[0].mxu0
    %v1042 = vadd.f32 %v985, %v1041
    %v1043 = vpop.f32.mrb[0].mxu0
    %1044 = vmatprep.mubr.bf16.mxu0 0
    %1045 = vmatmul.mubr.bf16.gmra.mrb[0].mxu0 %v1002
    %v1046 = vpop.f32.mrb[0].mxu0
    %v1047 = vadd.f32 %v985, %v1046
    %v1048 = vpop.f32.mrb[0].mxu0
    %v1049 = vpop.f32.mrb[0].mxu0
    %v1050 = vadd.f32 %v985, %v1049
    %v1051 = vpop.f32.mrb[0].mxu0
    %1052 = vdwg.mxu0
    %v1053 = vld [vmem:[%s6 + $0x1] sm:$0x1]
    %v1054 = vld [vmem:[%s6 + $0x2] sm:$0x1]
    %vm1055 = vcmask 523264
    %v1056 = vsel %vm1055, %v1039, 0.0
    %v1057 = vsel %vm1055, %v1042, 0.0
    %v1058 = vadd.f32 %v1056, %v1057
    %v1059 = vrot.slane %v1058, 4
    %v1060 = vadd.f32 %v1058, %v1059
    %v1061 = vrot.slane %v1060, 2
    %v1062 = vadd.f32 %v1060, %v1061
    %v1063 = vrot.slane %v1062, 1
    %v1064 = vadd.f32 %v1062, %v1063
    %v1065 = vsel %vm1055, %v1047, 0.0
    %v1066 = vsel %vm1055, %v1050, 0.0
    %v1067 = vadd.f32 %v1065, %v1066
    %v1068 = vrot.slane %v1067, 4
    %v1069 = vadd.f32 %v1067, %v1068
    %v1070 = vrot.slane %v1069, 2
    %v1071 = vadd.f32 %v1069, %v1070
    %v1072 = vrot.slane %v1071, 1
    %v1073 = vadd.f32 %v1071, %v1072
    %v1074 = vmul.f32 %v1064, %v139
    %v1075 = vmul.f32 %v1073, %v139
    %v1076 = vsub.f32 %v1039, %v1074
    %v1077 = vsub.f32 %v1042, %v1074
    %v1078 = vsub.f32 %v1047, %v1075
    %v1079 = vsub.f32 %v1050, %v1075
    %v1080 = vmul.f32 %v1076, %v1076
    %v1081 = vmul.f32 %v1077, %v1077
    %v1082 = vmul.f32 %v1078, %v1078
    %v1083 = vmul.f32 %v1079, %v1079
    %v1084 = vsel %vm1055, %v1080, 0.0
    %v1085 = vsel %vm1055, %v1081, 0.0
    %v1086 = vadd.f32 %v1084, %v1085
    %v1087 = vrot.slane %v1086, 4
    %v1088 = vadd.f32 %v1086, %v1087
    %v1089 = vrot.slane %v1088, 2
    %v1090 = vadd.f32 %v1088, %v1089
    %v1091 = vrot.slane %v1090, 1
    %v1092 = vadd.f32 %v1090, %v1091
    %v1093 = vsel %vm1055, %v1082, 0.0
    %v1094 = vsel %vm1055, %v1083, 0.0
    %v1095 = vadd.f32 %v1093, %v1094
    %v1096 = vrot.slane %v1095, 4
    %v1097 = vadd.f32 %v1095, %v1096
    %v1098 = vrot.slane %v1097, 2
    %v1099 = vadd.f32 %v1097, %v1098
    %v1100 = vrot.slane %v1099, 1
    %v1101 = vadd.f32 %v1099, %v1100
    %v1102 = vmul.f32 %v1092, %v139
    %v1103 = vmul.f32 %v1101, %v139
    %v1104 = vadd.f32 %v1102, 1e-05
    %v1105 = vadd.f32 %v1103, 1e-05
    %v1106 = vrsqrt.pop %v1104
    %v1107 = vrsqrt.pop %v1105
    %v1108 = vmul.f32 %v1076, %v1106
    %v1109 = vmul.f32 %v1077, %v1106
    %v1110 = vmul.f32 %v1078, %v1107
    %v1111 = vmul.f32 %v1079, %v1107
    %v1112 = vlaneseq
    %v1113 = vshrl.u32 %v1112, 7
    %v1114 = vsub.s32 0, %v1113
    %v1115 = vrot.slane %v1053, %v1114
    %v1116 = vmul.f32 %v1108, %v1115
    %v1117 = vmul.f32 %v1109, %v1115
    %v1118 = vmul.f32 %v1110, %v1115
    %v1119 = vmul.f32 %v1111, %v1115
    %v1120 = vlaneseq
    %v1121 = vshrl.u32 %v1120, 7
    %v1122 = vsub.s32 0, %v1121
    %v1123 = vrot.slane %v1054, %v1122
    %v1124 = vadd.f32 %v1116, %v1123
    %v1125 = vadd.f32 %v1117, %v1123
    %v1126 = vadd.f32 %v1118, %v1123
    %v1127 = vadd.f32 %v1119, %v1123
    %vm1128 = vcmp.ge.f32.partialorder %v1124, 0.0
    %vm1129 = vcmp.ge.f32.partialorder %v1125, 0.0
    %vm1130 = vcmp.ge.f32.partialorder %v1126, 0.0
    %vm1131 = vcmp.ge.f32.partialorder %v1127, 0.0
    %v1132 = vstv %s974
    %v1133 = vmul.f32 %v1124, %v1132
    %v1134 = vmul.f32 %v1125, %v1132
    %v1135 = vmul.f32 %v1126, %v1132
    %v1136 = vmul.f32 %v1127, %v1132
    %v1137 = vsel %vm1128, %v1124, %v1133
    %v1138 = vsel %vm1129, %v1125, %v1134
    %v1139 = vsel %vm1130, %v1126, %v1135
    %v1140 = vsel %vm1131, %v1127, %v1136
    %v1141 = vpack.c.bf16 %v1138, %v1137
    %v1142 = vpack.c.bf16 %v1140, %v1139
    %v1143 = vld [vmem:[%s3 + $0x20] sm:$0xf]
    %v1144 = vld [vmem:[%s3 + $0x24] sm:$0xf]
    %v1145 = vld [vmem:[%s3 + $0x28] sm:$0xf]
    %v1146 = vld [vmem:[%s3 + $0x2c] sm:$0xf]
    %v1147 = vld [vmem:[%s3 + $0x30] sm:$0xf]
    %v1148 = vld [vmem:[%s3 + $0x34] sm:$0xf]
    %v1149 = vld [vmem:[%s3 + $0x38] sm:$0xf]
    %v1150 = vld [vmem:[%s3 + $0x3c] sm:$0xf]
    %v1151 = vld [vmem:[%s6 + $0x3] sm:$0x1]
    %v1152 = vlaneseq
    %v1153 = vshrl.u32 %v1152, 7
    %v1154 = vsub.s32 0, %v1153
    %v1155 = vrot.slane %v1151, %v1154
    %v1164 = vunpack.c.l.b16 %v1143
    %v1165 = vunpack.c.l.b16 %v1144
    %v1166 = vunpack.c.l.b16 %v1145
    %v1167 = vunpack.c.l.b16 %v1146
    %v1168 = vunpack.c.l.b16 %v1147
    %v1169 = vunpack.c.l.b16 %v1148
    %v1170 = vunpack.c.l.b16 %v1149
    %v1171 = vunpack.c.l.b16 %v1150
    %v1172 = vpack.c.b16 %v1165, %v1164
    %v1173 = vpack.c.b16 %v1167, %v1166
    %v1174 = vpack.c.b16 %v1169, %v1168
    %v1175 = vpack.c.b16 %v1171, %v1170
    %v1181 = vsel %vm1055, %v1141, 0
    %v1184 = vsel %vm1055, %v1142, 0
    %1186 = vmatprep.subr.bf16.mxu0 0
    %1187 = vmatpush1.bf16.msra.mxu0 %v1172
    %1188 = vmatprep.subr.bf16.mxu0 0
    %1189 = vmatpush1.bf16.msra.mxu0 %v1173
    %1190 = vmatprep.subr.bf16.mxu0 0
    %1191 = vmatpush1.bf16.msra.mxu0 %v1174
    %1192 = vmatprep.subr.bf16.mxu0 0
    %1193 = vmatpush1.bf16.msra.mxu0 %v1175
    %1194 = vmatprep.subr.bf16.mxu0 0
    %1195 = vmatpush1.bf16.msra.mxu0 0
    %1196 = vmatprep.subr.bf16.mxu0 0
    %1197 = vmatpush1.bf16.msra.mxu0 0
    %1198 = vmatprep.subr.bf16.mxu0 0
    %1199 = vmatpush1.bf16.msra.mxu0 0
    %1200 = vmatprep.subr.bf16.mxu0 0
    %1201 = vmatpush1.bf16.msra.mxu0 0
    %1202 = vmatprep.subr.bf16.mxu0 0
    %1203 = vmatpush1.bf16.msra.mxu0 0
    %1204 = vmatprep.subr.bf16.mxu0 0
    %1205 = vmatpush1.bf16.msra.mxu0 0
    %1206 = vmatprep.subr.bf16.mxu0 0
    %1207 = vmatpush1.bf16.msra.mxu0 0
    %1208 = vmatprep.subr.bf16.mxu0 0
    %1209 = vmatpush1.bf16.msra.mxu0 0
    %1210 = vmatprep.subr.bf16.mxu0 0
    %1211 = vmatpush1.bf16.msra.mxu0 0
    %1212 = vmatprep.subr.bf16.mxu0 0
    %1213 = vmatpush1.bf16.msra.mxu0 0
    %1214 = vmatprep.subr.bf16.mxu0 0
    %1215 = vmatpush1.bf16.msra.mxu0 0
    %1216 = vmatprep.subr.bf16.mxu0 0
    %1217 = vmatpush1.bf16.msra.mxu0 0
    %1218 = vmatprep.mubr.bf16.mxu0 0
    %1219 = vmatmul.mubr.bf16.gmra.mrb[0].mxu0 %v1181
    %v1220 = vpop.f32.mrb[0].mxu0
    %v1221 = vadd.f32 %v1155, %v1220
    %v1222 = vpop.f32.mrb[0].mxu0
    %v1223 = vpop.f32.mrb[0].mxu0
    %v1224 = vadd.f32 %v1155, %v1223
    %v1225 = vpop.f32.mrb[0].mxu0
    %1226 = vmatprep.mubr.bf16.mxu0 0
    %1227 = vmatmul.mubr.bf16.gmra.mrb[0].mxu0 %v1184
    %v1228 = vpop.f32.mrb[0].mxu0
    %v1229 = vadd.f32 %v1155, %v1228
    %v1230 = vpop.f32.mrb[0].mxu0
    %v1231 = vpop.f32.mrb[0].mxu0
    %v1232 = vadd.f32 %v1155, %v1231
    %v1233 = vpop.f32.mrb[0].mxu0
    %1234 = vdwg.mxu0
    %v1235 = vtanh.pop %v1221
    %v1236 = vtanh.pop %v1224
    %v1237 = vtanh.pop %v1229
    %v1238 = vtanh.pop %v1232
    %1243 = vrot.lane.b32.xlu0 %v270, 32
    %v1244 = vpop.permute.xlu0 %1243
    %1245 = vrot.lane.b32.xlu0 %v273, 32
    %v1246 = vpop.permute.xlu0 %1245
    %1247 = vrot.lane.b32.xlu0 %v278, 32
    %v1248 = vpop.permute.xlu0 %1247
    %1249 = vrot.lane.b32.xlu0 %v281, 32
    %v1250 = vpop.permute.xlu0 %1249
    %v1255 = vsel %vm120, %v270, %v1244
    %v1256 = vsel %vm120, %v273, %v1246
    %v1257 = vsel %vm120, %v278, %v1248
    %v1258 = vsel %vm120, %v281, %v1250
    %v1259 = vmul.f32 %v1255, %v1235
    %v1260 = vmul.f32 %v1256, %v1236
    %v1261 = vmul.f32 %v1257, %v1237
    %v1262 = vmul.f32 %v1258, %v1238
    %v1263 = vpack.c.bf16 %v1260, %v1259
    %v1264 = vpack.c.bf16 %v1262, %v1261
    %v1265 = vld [vmem:[%s3 + $0x40] sm:$0xf]
    %v1266 = vld [vmem:[%s3 + $0x44] sm:$0xf]
    %v1267 = vld [vmem:[%s3 + $0x48] sm:$0xf]
    %v1268 = vld [vmem:[%s3 + $0x4c] sm:$0xf]
    %v1269 = vld [vmem:[%s3 + $0x50] sm:$0xf]
    %v1270 = vld [vmem:[%s3 + $0x54] sm:$0xf]
    %v1271 = vld [vmem:[%s3 + $0x58] sm:$0xf]
    %v1272 = vld [vmem:[%s3 + $0x5c] sm:$0xf]
    %v1273 = vld [vmem:[%s6 + $0x4] sm:$0x1]
    %v1274 = vlaneseq
    %v1275 = vshrl.u32 %v1274, 7
    %v1276 = vsub.s32 0, %v1275
    %v1277 = vrot.slane %v1273, %v1276
    %v1286 = vunpack.c.l.b16 %v1265
    %v1287 = vunpack.c.l.b16 %v1266
    %v1288 = vunpack.c.l.b16 %v1267
    %v1289 = vunpack.c.l.b16 %v1268
    %v1290 = vunpack.c.l.b16 %v1269
    %v1291 = vunpack.c.l.b16 %v1270
    %v1292 = vunpack.c.l.b16 %v1271
    %v1293 = vunpack.c.l.b16 %v1272
    %v1294 = vpack.c.b16 %v1287, %v1286
    %v1295 = vpack.c.b16 %v1289, %v1288
    %v1296 = vpack.c.b16 %v1291, %v1290
    %v1297 = vpack.c.b16 %v1293, %v1292
    %v1303 = vsel %vm1055, %v1263, 0
    %v1306 = vsel %vm1055, %v1264, 0
    %1308 = vmatprep.subr.bf16.mxu0 0
    %1309 = vmatpush1.bf16.msra.mxu0 %v1294
    %1310 = vmatprep.subr.bf16.mxu0 0
    %1311 = vmatpush1.bf16.msra.mxu0 %v1295
    %1312 = vmatprep.subr.bf16.mxu0 0
    %1313 = vmatpush1.bf16.msra.mxu0 %v1296
    %1314 = vmatprep.subr.bf16.mxu0 0
    %1315 = vmatpush1.bf16.msra.mxu0 %v1297
    %1316 = vmatprep.subr.bf16.mxu0 0
    %1317 = vmatpush1.bf16.msra.mxu0 0
    %1318 = vmatprep.subr.bf16.mxu0 0
    %1319 = vmatpush1.bf16.msra.mxu0 0
    %1320 = vmatprep.subr.bf16.mxu0 0
    %1321 = vmatpush1.bf16.msra.mxu0 0
    %1322 = vmatprep.subr.bf16.mxu0 0
    %1323 = vmatpush1.bf16.msra.mxu0 0
    %1324 = vmatprep.subr.bf16.mxu0 0
    %1325 = vmatpush1.bf16.msra.mxu0 0
    %1326 = vmatprep.subr.bf16.mxu0 0
    %1327 = vmatpush1.bf16.msra.mxu0 0
    %1328 = vmatprep.subr.bf16.mxu0 0
    %1329 = vmatpush1.bf16.msra.mxu0 0
    %1330 = vmatprep.subr.bf16.mxu0 0
    %1331 = vmatpush1.bf16.msra.mxu0 0
    %1332 = vmatprep.subr.bf16.mxu0 0
    %1333 = vmatpush1.bf16.msra.mxu0 0
    %1334 = vmatprep.subr.bf16.mxu0 0
    %1335 = vmatpush1.bf16.msra.mxu0 0
    %1336 = vmatprep.subr.bf16.mxu0 0
    %1337 = vmatpush1.bf16.msra.mxu0 0
    %1338 = vmatprep.subr.bf16.mxu0 0
    %1339 = vmatpush1.bf16.msra.mxu0 0
    %1340 = vmatprep.mubr.bf16.mxu0 0
    %1341 = vmatmul.mubr.bf16.gmra.mrb[0].mxu0 %v1303
    %v1342 = vpop.f32.mrb[0].mxu0
    %v1343 = vadd.f32 %v1277, %v1342
    %v1344 = vpop.f32.mrb[0].mxu0
    %v1345 = vpop.f32.mrb[0].mxu0
    %v1346 = vadd.f32 %v1277, %v1345
    %v1347 = vpop.f32.mrb[0].mxu0
    %1348 = vmatprep.mubr.bf16.mxu0 0
    %1349 = vmatmul.mubr.bf16.gmra.mrb[0].mxu0 %v1306
    %v1350 = vpop.f32.mrb[0].mxu0
    %v1351 = vadd.f32 %v1277, %v1350
    %v1352 = vpop.f32.mrb[0].mxu0
    %v1353 = vpop.f32.mrb[0].mxu0
    %v1354 = vadd.f32 %v1277, %v1353
    %v1355 = vpop.f32.mrb[0].mxu0
    %1356 = vdwg.mxu0
    %v1357 = vld [vmem:[%s6 + $0x5] sm:$0x1]
    %v1358 = vld [vmem:[%s6 + $0x6] sm:$0x1]
    %v1359 = vsel %vm1055, %v1343, 0.0
    %v1360 = vsel %vm1055, %v1346, 0.0
    %v1361 = vadd.f32 %v1359, %v1360
    %v1362 = vrot.slane %v1361, 4
    %v1363 = vadd.f32 %v1361, %v1362
    %v1364 = vrot.slane %v1363, 2
    %v1365 = vadd.f32 %v1363, %v1364
    %v1366 = vrot.slane %v1365, 1
    %v1367 = vadd.f32 %v1365, %v1366
    %v1368 = vsel %vm1055, %v1351, 0.0
    %v1369 = vsel %vm1055, %v1354, 0.0
    %v1370 = vadd.f32 %v1368, %v1369
    %v1371 = vrot.slane %v1370, 4
    %v1372 = vadd.f32 %v1370, %v1371
    %v1373 = vrot.slane %v1372, 2
    %v1374 = vadd.f32 %v1372, %v1373
    %v1375 = vrot.slane %v1374, 1
    %v1376 = vadd.f32 %v1374, %v1375
    %v1377 = vmul.f32 %v1367, %v139
    %v1378 = vmul.f32 %v1376, %v139
    %v1379 = vsub.f32 %v1343, %v1377
    %v1380 = vsub.f32 %v1346, %v1377
    %v1381 = vsub.f32 %v1351, %v1378
    %v1382 = vsub.f32 %v1354, %v1378
    %v1383 = vmul.f32 %v1379, %v1379
    %v1384 = vmul.f32 %v1380, %v1380
    %v1385 = vmul.f32 %v1381, %v1381
    %v1386 = vmul.f32 %v1382, %v1382
    %v1387 = vsel %vm1055, %v1383, 0.0
    %v1388 = vsel %vm1055, %v1384, 0.0
    %v1389 = vadd.f32 %v1387, %v1388
    %v1390 = vrot.slane %v1389, 4
    %v1391 = vadd.f32 %v1389, %v1390
    %v1392 = vrot.slane %v1391, 2
    %v1393 = vadd.f32 %v1391, %v1392
    %v1394 = vrot.slane %v1393, 1
    %v1395 = vadd.f32 %v1393, %v1394
    %v1396 = vsel %vm1055, %v1385, 0.0
    %v1397 = vsel %vm1055, %v1386, 0.0
    %v1398 = vadd.f32 %v1396, %v1397
    %v1399 = vrot.slane %v1398, 4
    %v1400 = vadd.f32 %v1398, %v1399
    %v1401 = vrot.slane %v1400, 2
    %v1402 = vadd.f32 %v1400, %v1401
    %v1403 = vrot.slane %v1402, 1
    %v1404 = vadd.f32 %v1402, %v1403
    %v1405 = vmul.f32 %v1395, %v139
    %v1406 = vmul.f32 %v1404, %v139
    %v1407 = vadd.f32 %v1405, 1e-05
    %v1408 = vadd.f32 %v1406, 1e-05
    %v1409 = vrsqrt.pop %v1407
    %v1410 = vrsqrt.pop %v1408
    %v1411 = vmul.f32 %v1379, %v1409
    %v1412 = vmul.f32 %v1380, %v1409
    %v1413 = vmul.f32 %v1381, %v1410
    %v1414 = vmul.f32 %v1382, %v1410
    %v1415 = vlaneseq
    %v1416 = vshrl.u32 %v1415, 7
    %v1417 = vsub.s32 0, %v1416
    %v1418 = vrot.slane %v1357, %v1417
    %v1419 = vmul.f32 %v1411, %v1418
    %v1420 = vmul.f32 %v1412, %v1418
    %v1421 = vmul.f32 %v1413, %v1418
    %v1422 = vmul.f32 %v1414, %v1418
    %v1423 = vlaneseq
    %v1424 = vshrl.u32 %v1423, 7
    %v1425 = vsub.s32 0, %v1424
    %v1426 = vrot.slane %v1358, %v1425
    %v1427 = vadd.f32 %v1419, %v1426
    %v1428 = vadd.f32 %v1420, %v1426
    %v1429 = vadd.f32 %v1421, %v1426
    %v1430 = vadd.f32 %v1422, %v1426
    %vm1431 = vcmp.ge.f32.partialorder %v1427, 0.0
    %vm1432 = vcmp.ge.f32.partialorder %v1428, 0.0
    %vm1433 = vcmp.ge.f32.partialorder %v1429, 0.0
    %vm1434 = vcmp.ge.f32.partialorder %v1430, 0.0
    %v1435 = vmul.f32 %v1427, 0.01
    %v1436 = vmul.f32 %v1428, 0.01
    %v1437 = vmul.f32 %v1429, 0.01
    %v1438 = vmul.f32 %v1430, 0.01
    %v1439 = vsel %vm1431, %v1427, %v1435
    %v1440 = vsel %vm1432, %v1428, %v1436
    %v1441 = vsel %vm1433, %v1429, %v1437
    %v1442 = vsel %vm1434, %v1430, %v1438
    %v1443 = vpack.c.bf16 %v1440, %v1439
    %v1444 = vpack.c.bf16 %v1442, %v1441
    %v1445 = vld [vmem:[%s4] sm:$0xf]
    %v1446 = vld [vmem:[%s4 + $0x4] sm:$0xf]
    %v1447 = vld [vmem:[%s4 + $0x8] sm:$0xf]
    %v1448 = vld [vmem:[%s4 + $0xc] sm:$0xf]
    %v1449 = vld [vmem:[%s4 + $0x10] sm:$0xf]
    %v1450 = vld [vmem:[%s4 + $0x14] sm:$0xf]
    %v1451 = vld [vmem:[%s4 + $0x18] sm:$0xf]
    %v1452 = vld [vmem:[%s4 + $0x1c] sm:$0xf]
    %v1461 = vunpack.c.l.b16 %v1445
    %v1462 = vunpack.c.l.b16 %v1446
    %v1463 = vunpack.c.l.b16 %v1447
    %v1464 = vunpack.c.l.b16 %v1448
    %v1465 = vunpack.c.l.b16 %v1449
    %v1466 = vunpack.c.l.b16 %v1450
    %v1467 = vunpack.c.l.b16 %v1451
    %v1468 = vunpack.c.l.b16 %v1452
    %v1469 = vpack.c.b16 %v1462, %v1461
    %v1470 = vpack.c.b16 %v1464, %v1463
    %v1471 = vpack.c.b16 %v1466, %v1465
    %v1472 = vpack.c.b16 %v1468, %v1467
    %v1478 = vsel %vm1055, %v1443, 0
    %v1481 = vsel %vm1055, %v1444, 0
    %1483 = vmatprep.subr.bf16.mxu0 0
    %1484 = vmatpush1.bf16.msra.mxu0 %v1469
    %1485 = vmatprep.subr.bf16.mxu0 0
    %1486 = vmatpush1.bf16.msra.mxu0 %v1470
    %1487 = vmatprep.subr.bf16.mxu0 0
    %1488 = vmatpush1.bf16.msra.mxu0 %v1471
    %1489 = vmatprep.subr.bf16.mxu0 0
    %1490 = vmatpush1.bf16.msra.mxu0 %v1472
    %1491 = vmatprep.subr.bf16.mxu0 0
    %1492 = vmatpush1.bf16.msra.mxu0 0
    %1493 = vmatprep.subr.bf16.mxu0 0
    %1494 = vmatpush1.bf16.msra.mxu0 0
    %1495 = vmatprep.subr.bf16.mxu0 0
    %1496 = vmatpush1.bf16.msra.mxu0 0
    %1497 = vmatprep.subr.bf16.mxu0 0
    %1498 = vmatpush1.bf16.msra.mxu0 0
    %1499 = vmatprep.subr.bf16.mxu0 0
    %1500 = vmatpush1.bf16.msra.mxu0 0
    %1501 = vmatprep.subr.bf16.mxu0 0
    %1502 = vmatpush1.bf16.msra.mxu0 0
    %1503 = vmatprep.subr.bf16.mxu0 0
    %1504 = vmatpush1.bf16.msra.mxu0 0
    %1505 = vmatprep.subr.bf16.mxu0 0
    %1506 = vmatpush1.bf16.msra.mxu0 0
    %1507 = vmatprep.subr.bf16.mxu0 0
    %1508 = vmatpush1.bf16.msra.mxu0 0
    %1509 = vmatprep.subr.bf16.mxu0 0
    %1510 = vmatpush1.bf16.msra.mxu0 0
    %1511 = vmatprep.subr.bf16.mxu0 0
    %1512 = vmatpush1.bf16.msra.mxu0 0
    %1513 = vmatprep.subr.bf16.mxu0 0
    %1514 = vmatpush1.bf16.msra.mxu0 0
    %1515 = vmatprep.mubr.bf16.mxu0 0
    %1516 = vmatmul.mubr.bf16.gmra.mrb[0].mxu0 %v1478
    %v1517 = vpop.f32.mrb[0].mxu0
    %v1518 = vadd.f32 0.0, %v1517
    %v1519 = vpop.f32.mrb[0].mxu0
    %v1520 = vpop.f32.mrb[0].mxu0
    %v1521 = vadd.f32 0.0, %v1520
    %v1522 = vpop.f32.mrb[0].mxu0
    %1523 = vmatprep.mubr.bf16.mxu0 0
    %1524 = vmatmul.mubr.bf16.gmra.mrb[0].mxu0 %v1481
    %v1525 = vpop.f32.mrb[0].mxu0
    %v1526 = vadd.f32 0.0, %v1525
    %v1527 = vpop.f32.mrb[0].mxu0
    %v1528 = vpop.f32.mrb[0].mxu0
    %v1529 = vadd.f32 0.0, %v1528
    %v1530 = vpop.f32.mrb[0].mxu0
    %1531 = vdwg.mxu0
    %1532 = vst.msk [vmem:[%s8] sm:$0xff] %vm120, %v1518
    %1533 = vst.msk [vmem:[%s8 + $0x8] sm:$0xff] %vm120, %v1521
    %1534 = vst.msk [vmem:[%s8 + $0x10] sm:$0xff] %vm120, %v1526
    %1535 = vst.msk [vmem:[%s8 + $0x18] sm:$0xff] %vm120, %v1529
    // Predicated region
    $region38: #{model_forward.1} parent=1 // pred_check
      _
    $region39: #{model_forward.1} parent=1 // pred_check_branch
      %1537 = sbr.rel (0) target = $region41
    $region40: #{model_forward.1} parent=1 // pred_region
      _
    $region41: #{model_forward.1} parent=1 // pred_fallthru
      _
    // Predicated region
    $region42: #{model_forward.1} parent=1 // pred_check
      _
    $region43: #{model_forward.1} parent=1 // pred_check_branch
      %1539 = sbr.rel (0) target = $region45
    $region44: #{model_forward.1} parent=1 // pred_region
      _
    $region45: #{model_forward.1} parent=1 // pred_fallthru
      _
    %1540 = vsyncpa [#allocation3], 1

</llo_original>
